<compile_context>
chip_gen: v5e
topology: v5e:2x2
jax: 0.10.0
libtpu: 0.0.40
codegen_flags: <defaults>
</compile_context>

<pallas_src>
import jax
import jax.numpy as jnp
from jax import lax
from jax.experimental import pallas as pl
from jax.experimental.pallas import tpu as pltpu


def lstm_net_kernel(pre_ref, whh_ref, wout_ref, bout_ref, y_ref):
    # pre_ref : (T, 4, Bp, H) f32  hoisted x@W_ih + (b_ih + b_hh),
    #                              time-major, gate-major (gate order i, f, g, o)
    # whh_ref : (4, H, H)          per-gate recurrent weights, (H_in, H_out);
    #                              dtype = MXU operand dtype (f32 or bf16)
    # wout_ref: (H, O) f32         output.weight.T
    # bout_ref: (1, O) f32         output.bias
    # y_ref   : (Bp, O) f32
    T = pre_ref.shape[0]
    Bp, H = pre_ref.shape[2], pre_ref.shape[3]

    whh = whh_ref[...]                                  # load once (loop-invariant)
    w_i, w_f, w_g, w_o = whh[0], whh[1], whh[2], whh[3]
    mxu_dtype = whh.dtype

    h0 = jnp.zeros((Bp, H), jnp.float32)
    c0 = jnp.zeros((Bp, H), jnp.float32)

    def step(t, carry):
        h, c = carry
        pre_t = pre_ref[t]                              # (4, Bp, H); every gate slab
                                                        # is lane-aligned at 0..H-1
        hm = h.astype(mxu_dtype)                        # bf16 operands, f32 accumulate
        zi = pre_t[0] + jnp.dot(hm, w_i, preferred_element_type=jnp.float32)
        zf = pre_t[1] + jnp.dot(hm, w_f, preferred_element_type=jnp.float32)
        zg = pre_t[2] + jnp.dot(hm, w_g, preferred_element_type=jnp.float32)
        zo = pre_t[3] + jnp.dot(hm, w_o, preferred_element_type=jnp.float32)
        # Four independent EUP pushes (pipeline through the FIFO); no lane
        # realignment needed since everything sits at lanes 0..H-1.
        i = jax.nn.sigmoid(zi)
        f = jax.nn.sigmoid(zf)
        g = jnp.tanh(zg)
        o = jax.nn.sigmoid(zo)
        c_new = f * c + i * g
        h_new = o * jnp.tanh(c_new)
        return (h_new, c_new)

    # T is static and small: fully unroll so the LLO scheduler sees across
    # timesteps and per-iteration scf.for overhead disappears.
    h_T, _ = lax.fori_loop(0, T, step, (h0, c0), unroll=True)

    y_ref[...] = (jnp.dot(h_T, wout_ref[...], preferred_element_type=jnp.float32)
                  + bout_ref[...])


def lstm_net_forward(x, params, *, recurrent_dtype=jnp.bfloat16):
    """x: (B, T) float32, mirroring the PyTorch forward's x.unsqueeze(2)."""
    B, T = x.shape
    H = params["w_hh"].shape[1]
    O = params["w_out"].shape[0]

    # Pad batch to a multiple of 8 (f32 sublane tile); padded rows are zeros.
    Bp = ((B + 7) // 8) * 8
    x_pad = jnp.zeros((Bp, T), jnp.float32).at[:B].set(x.astype(jnp.float32))

    # Hoisted input projection: one well-shaped batched matmul outside the
    # serial recurrence (XLA op), bias folded in.
    wih_t = params["w_ih"].astype(jnp.float32).T                      # (F, 4H)
    bias = (params["b_ih"] + params["b_hh"]).astype(jnp.float32)      # (4H,)
    x3 = x_pad[:, :, None]                                            # (Bp, T, 1)
    pre = jnp.einsum("btf,fg->btg", x3, wih_t) + bias                 # (Bp, T, 4H)
    # -> time-major, gate-major: (T, 4, Bp, H)
    pre_tm = pre.reshape(Bp, T, 4, H).transpose(1, 2, 0, 3)

    # Per-gate recurrent weights, (H_in, H_out), in the MXU operand dtype.
    whh_g = (params["w_hh"].astype(jnp.float32)
             .reshape(4, H, H).transpose(0, 2, 1)).astype(recurrent_dtype)

    wout_t = params["w_out"].astype(jnp.float32).T                    # (H, O)
    bout = params["b_out"].astype(jnp.float32)[None, :]               # (1, O)

    vmem = pl.BlockSpec(memory_space=pltpu.MemorySpace.VMEM)
    y_pad = pl.pallas_call(
        lstm_net_kernel,
        out_shape=jax.ShapeDtypeStruct((Bp, O), jnp.float32),
        in_specs=[vmem] * 4,
        out_specs=vmem,
    )(pre_tm, whh_g, wout_t, bout)
    return y_pad[:B]


def init_params(key, n_feature, n_hidden, n_output):
    """Deterministic init, PyTorch-style U(-1/sqrt(H), 1/sqrt(H))."""
    ks = jax.random.split(key, 6)
    s_lstm = 1.0 / jnp.sqrt(n_hidden)
    s_lin = 1.0 / jnp.sqrt(n_hidden)
    u = lambda k, shape, s: jax.random.uniform(k, shape, jnp.float32, -s, s)
    return {
        "w_ih": u(ks[0], (4 * n_hidden, n_feature), s_lstm),
        "w_hh": u(ks[1], (4 * n_hidden, n_hidden), s_lstm),
        "b_ih": u(ks[2], (4 * n_hidden,), s_lstm),
        "b_hh": u(ks[3], (4 * n_hidden,), s_lstm),
        "w_out": u(ks[4], (n_output, n_hidden), s_lin),
        "b_out": u(ks[5], (n_output,), s_lin),
    }


def reference_forward(x, params):
    """Pure-JAX reference of the PyTorch forward (for validation)."""
    B, T = x.shape
    H = params["w_hh"].shape[1]
    x3 = x[..., None].astype(jnp.float32)  # (B, T, 1)
    wih_t, whh_t = params["w_ih"].T, params["w_hh"].T
    b = params["b_ih"] + params["b_hh"]

    def step(carry, x_t):
        h, c = carry
        gates = x_t @ wih_t + h @ whh_t + b
        i = jax.nn.sigmoid(gates[:, 0:H])
        f = jax.nn.sigmoid(gates[:, H:2 * H])
        g = jnp.tanh(gates[:, 2 * H:3 * H])
        o = jax.nn.sigmoid(gates[:, 3 * H:4 * H])
        c = f * c + i * g
        h = o * jnp.tanh(c)
        return (h, c), None

    (h_T, _), _ = lax.scan(step,
                           (jnp.zeros((B, H), jnp.float32),
                            jnp.zeros((B, H), jnp.float32)),
                           jnp.transpose(x3, (1, 0, 2)))
    return h_T @ params["w_out"].T + params["b_out"]


if __name__ == "__main__":
    B, T = 2, 8
    n_feature, n_hidden, n_output = 1, 32, 4

    key = jax.random.PRNGKey(0)
    k_x, k_p = jax.random.split(key)
    x = jax.random.normal(k_x, (B, T), jnp.float32)
    params = init_params(k_p, n_feature, n_hidden, n_output)

    y_ref = reference_forward(x, params)

    # Exact-semantics path (f32 recurrent matmul): matches the reference to
    # float32 round-off.
    y_f32 = jax.block_until_ready(
        lstm_net_forward(x, params, recurrent_dtype=jnp.float32))
    assert y_f32.shape == (B, n_output)
    assert jnp.allclose(y_f32, y_ref, atol=1e-5, rtol=1e-5), (y_f32, y_ref)

    # Perf path (default): bf16 MXU operands for h @ W_hh with f32 accumulation
    # (v6e/v7x recommendation); looser tolerance covers bf16 operand rounding.
    y_bf16 = jax.block_until_ready(lstm_net_forward(x, params))
    assert y_bf16.shape == (B, n_output)
    assert jnp.allclose(y_bf16, y_ref, atol=5e-2, rtol=5e-2), (y_bf16, y_ref)

    print("KERNEL_OK")
</pallas_src>

<mosaic_0001>
module attributes {stable_mosaic.version = 11 : i64} {
  func.func @lstm_net_kernel(%arg0: memref<8x4x8x32xf32, #tpu.memory_space<vmem>>, %arg1: memref<4x32x32xf32, #tpu.memory_space<vmem>>, %arg2: memref<32x4xf32, #tpu.memory_space<vmem>>, %arg3: memref<1x4xf32, #tpu.memory_space<vmem>>, %arg4: memref<8x4xf32, #tpu.memory_space<vmem>>) attributes {dimension_semantics = [], scalar_prefetch = 0 : i64, scratch_operands = 0 : i64, tpu.core_type = #tpu.core_type<tc>} {
    %c0 = arith.constant 0 : index
    %c0_0 = arith.constant 0 : index
    %c0_1 = arith.constant 0 : index
    %0 = vector.load %arg1[%c0, %c0_0, %c0_1] : memref<4x32x32xf32, #tpu.memory_space<vmem>>, vector<4x32x32xf32>
    %1 = vector.extract_strided_slice %0 {offsets = [0, 0, 0], sizes = [1, 32, 32], strides = [1, 1, 1]} : vector<4x32x32xf32> to vector<1x32x32xf32>
    %2 = vector.shape_cast %1 : vector<1x32x32xf32> to vector<32x32xf32>
    %3 = vector.extract_strided_slice %0 {offsets = [1, 0, 0], sizes = [1, 32, 32], strides = [1, 1, 1]} : vector<4x32x32xf32> to vector<1x32x32xf32>
    %4 = vector.shape_cast %3 : vector<1x32x32xf32> to vector<32x32xf32>
    %5 = vector.extract_strided_slice %0 {offsets = [2, 0, 0], sizes = [1, 32, 32], strides = [1, 1, 1]} : vector<4x32x32xf32> to vector<1x32x32xf32>
    %6 = vector.shape_cast %5 : vector<1x32x32xf32> to vector<32x32xf32>
    %7 = vector.extract_strided_slice %0 {offsets = [3, 0, 0], sizes = [1, 32, 32], strides = [1, 1, 1]} : vector<4x32x32xf32> to vector<1x32x32xf32>
    %8 = vector.shape_cast %7 : vector<1x32x32xf32> to vector<32x32xf32>
    %cst = arith.constant 0.000000e+00 : f32
    %9 = vector.broadcast %cst : f32 to vector<8x32xf32>
    %cst_2 = arith.constant 0.000000e+00 : f32
    %10 = vector.broadcast %cst_2 : f32 to vector<8x32xf32>
    %c0_i32 = arith.constant 0 : i32
    %11 = arith.index_cast %c0_i32 : i32 to index
    %c0_3 = arith.constant 0 : index
    %c0_4 = arith.constant 0 : index
    %c0_5 = arith.constant 0 : index
    %12 = vector.load %arg0[%11, %c0_3, %c0_4, %c0_5] : memref<8x4x8x32xf32, #tpu.memory_space<vmem>>, vector<1x4x8x32xf32>
    %13 = vector.shape_cast %12 : vector<1x4x8x32xf32> to vector<4x8x32xf32>
    %14 = vector.extract_strided_slice %13 {offsets = [0, 0, 0], sizes = [1, 8, 32], strides = [1, 1, 1]} : vector<4x8x32xf32> to vector<1x8x32xf32>
    %15 = vector.shape_cast %14 : vector<1x8x32xf32> to vector<8x32xf32>
    %cst_6 = arith.constant dense<0.000000e+00> : vector<8x32xf32>
    %16 = tpu.matmul %9, %2, %cst_6 {dimension_numbers = #tpu.dot_dimension_numbers<[1], [0], [0], [1], [0, 0, 1, 1], [], []>} : vector<8x32xf32>, vector<32x32xf32>, vector<8x32xf32> -> vector<8x32xf32>
    %17 = arith.addf %15, %16 : vector<8x32xf32>
    %18 = vector.extract_strided_slice %13 {offsets = [1, 0, 0], sizes = [1, 8, 32], strides = [1, 1, 1]} : vector<4x8x32xf32> to vector<1x8x32xf32>
    %19 = vector.shape_cast %18 : vector<1x8x32xf32> to vector<8x32xf32>
    %cst_7 = arith.constant dense<0.000000e+00> : vector<8x32xf32>
    %20 = tpu.matmul %9, %4, %cst_7 {dimension_numbers = #tpu.dot_dimension_numbers<[1], [0], [0], [1], [0, 0, 1, 1], [], []>} : vector<8x32xf32>, vector<32x32xf32>, vector<8x32xf32> -> vector<8x32xf32>
    %21 = arith.addf %19, %20 : vector<8x32xf32>
    %22 = vector.extract_strided_slice %13 {offsets = [2, 0, 0], sizes = [1, 8, 32], strides = [1, 1, 1]} : vector<4x8x32xf32> to vector<1x8x32xf32>
    %23 = vector.shape_cast %22 : vector<1x8x32xf32> to vector<8x32xf32>
    %cst_8 = arith.constant dense<0.000000e+00> : vector<8x32xf32>
    %24 = tpu.matmul %9, %6, %cst_8 {dimension_numbers = #tpu.dot_dimension_numbers<[1], [0], [0], [1], [0, 0, 1, 1], [], []>} : vector<8x32xf32>, vector<32x32xf32>, vector<8x32xf32> -> vector<8x32xf32>
    %25 = arith.addf %23, %24 : vector<8x32xf32>
    %26 = vector.extract_strided_slice %13 {offsets = [3, 0, 0], sizes = [1, 8, 32], strides = [1, 1, 1]} : vector<4x8x32xf32> to vector<1x8x32xf32>
    %27 = vector.shape_cast %26 : vector<1x8x32xf32> to vector<8x32xf32>
    %cst_9 = arith.constant dense<0.000000e+00> : vector<8x32xf32>
    %28 = tpu.matmul %9, %8, %cst_9 {dimension_numbers = #tpu.dot_dimension_numbers<[1], [0], [0], [1], [0, 0, 1, 1], [], []>} : vector<8x32xf32>, vector<32x32xf32>, vector<8x32xf32> -> vector<8x32xf32>
    %29 = arith.addf %27, %28 : vector<8x32xf32>
    %30 = arith.negf %17 : vector<8x32xf32>
    %31 = math.exp %30 : vector<8x32xf32>
    %cst_10 = arith.constant 1.000000e+00 : f32
    %32 = vector.broadcast %cst_10 : f32 to vector<8x32xf32>
    %33 = arith.addf %32, %31 : vector<8x32xf32>
    %34 = arith.divf %32, %33 : vector<8x32xf32>
    %35 = arith.negf %21 : vector<8x32xf32>
    %36 = math.exp %35 : vector<8x32xf32>
    %cst_11 = arith.constant 1.000000e+00 : f32
    %37 = vector.broadcast %cst_11 : f32 to vector<8x32xf32>
    %38 = arith.addf %37, %36 : vector<8x32xf32>
    %39 = arith.divf %37, %38 : vector<8x32xf32>
    %40 = math.tanh %25 : vector<8x32xf32>
    %41 = arith.negf %29 : vector<8x32xf32>
    %42 = math.exp %41 : vector<8x32xf32>
    %cst_12 = arith.constant 1.000000e+00 : f32
    %43 = vector.broadcast %cst_12 : f32 to vector<8x32xf32>
    %44 = arith.addf %43, %42 : vector<8x32xf32>
    %45 = arith.divf %43, %44 : vector<8x32xf32>
    %46 = arith.mulf %39, %10 : vector<8x32xf32>
    %47 = arith.mulf %34, %40 : vector<8x32xf32>
    %48 = arith.addf %46, %47 : vector<8x32xf32>
    %49 = math.tanh %48 : vector<8x32xf32>
    %50 = arith.mulf %45, %49 : vector<8x32xf32>
    %c1_i32 = arith.constant 1 : i32
    %51 = arith.index_cast %c1_i32 : i32 to index
    %c0_13 = arith.constant 0 : index
    %c0_14 = arith.constant 0 : index
    %c0_15 = arith.constant 0 : index
    %52 = vector.load %arg0[%51, %c0_13, %c0_14, %c0_15] : memref<8x4x8x32xf32, #tpu.memory_space<vmem>>, vector<1x4x8x32xf32>
    %53 = vector.shape_cast %52 : vector<1x4x8x32xf32> to vector<4x8x32xf32>
    %54 = vector.extract_strided_slice %53 {offsets = [0, 0, 0], sizes = [1, 8, 32], strides = [1, 1, 1]} : vector<4x8x32xf32> to vector<1x8x32xf32>
    %55 = vector.shape_cast %54 : vector<1x8x32xf32> to vector<8x32xf32>
    %cst_16 = arith.constant dense<0.000000e+00> : vector<8x32xf32>
    %56 = tpu.matmul %50, %2, %cst_16 {dimension_numbers = #tpu.dot_dimension_numbers<[1], [0], [0], [1], [0, 0, 1, 1], [], []>} : vector<8x32xf32>, vector<32x32xf32>, vector<8x32xf32> -> vector<8x32xf32>
    %57 = arith.addf %55, %56 : vector<8x32xf32>
    %58 = vector.extract_strided_slice %53 {offsets = [1, 0, 0], sizes = [1, 8, 32], strides = [1, 1, 1]} : vector<4x8x32xf32> to vector<1x8x32xf32>
    %59 = vector.shape_cast %58 : vector<1x8x32xf32> to vector<8x32xf32>
    %cst_17 = arith.constant dense<0.000000e+00> : vector<8x32xf32>
    %60 = tpu.matmul %50, %4, %cst_17 {dimension_numbers = #tpu.dot_dimension_numbers<[1], [0], [0], [1], [0, 0, 1, 1], [], []>} : vector<8x32xf32>, vector<32x32xf32>, vector<8x32xf32> -> vector<8x32xf32>
    %61 = arith.addf %59, %60 : vector<8x32xf32>
    %62 = vector.extract_strided_slice %53 {offsets = [2, 0, 0], sizes = [1, 8, 32], strides = [1, 1, 1]} : vector<4x8x32xf32> to vector<1x8x32xf32>
    %63 = vector.shape_cast %62 : vector<1x8x32xf32> to vector<8x32xf32>
    %cst_18 = arith.constant dense<0.000000e+00> : vector<8x32xf32>
    %64 = tpu.matmul %50, %6, %cst_18 {dimension_numbers = #tpu.dot_dimension_numbers<[1], [0], [0], [1], [0, 0, 1, 1], [], []>} : vector<8x32xf32>, vector<32x32xf32>, vector<8x32xf32> -> vector<8x32xf32>
    %65 = arith.addf %63, %64 : vector<8x32xf32>
    %66 = vector.extract_strided_slice %53 {offsets = [3, 0, 0], sizes = [1, 8, 32], strides = [1, 1, 1]} : vector<4x8x32xf32> to vector<1x8x32xf32>
    %67 = vector.shape_cast %66 : vector<1x8x32xf32> to vector<8x32xf32>
    %cst_19 = arith.constant dense<0.000000e+00> : vector<8x32xf32>
    %68 = tpu.matmul %50, %8, %cst_19 {dimension_numbers = #tpu.dot_dimension_numbers<[1], [0], [0], [1], [0, 0, 1, 1], [], []>} : vector<8x32xf32>, vector<32x32xf32>, vector<8x32xf32> -> vector<8x32xf32>
    %69 = arith.addf %67, %68 : vector<8x32xf32>
    %70 = arith.negf %57 : vector<8x32xf32>
    %71 = math.exp %70 : vector<8x32xf32>
    %cst_20 = arith.constant 1.000000e+00 : f32
    %72 = vector.broadcast %cst_20 : f32 to vector<8x32xf32>
    %73 = arith.addf %72, %71 : vector<8x32xf32>
    %74 = arith.divf %72, %73 : vector<8x32xf32>
    %75 = arith.negf %61 : vector<8x32xf32>
    %76 = math.exp %75 : vector<8x32xf32>
    %cst_21 = arith.constant 1.000000e+00 : f32
    %77 = vector.broadcast %cst_21 : f32 to vector<8x32xf32>
    %78 = arith.addf %77, %76 : vector<8x32xf32>
    %79 = arith.divf %77, %78 : vector<8x32xf32>
    %80 = math.tanh %65 : vector<8x32xf32>
    %81 = arith.negf %69 : vector<8x32xf32>
    %82 = math.exp %81 : vector<8x32xf32>
    %cst_22 = arith.constant 1.000000e+00 : f32
    %83 = vector.broadcast %cst_22 : f32 to vector<8x32xf32>
    %84 = arith.addf %83, %82 : vector<8x32xf32>
    %85 = arith.divf %83, %84 : vector<8x32xf32>
    %86 = arith.mulf %79, %48 : vector<8x32xf32>
    %87 = arith.mulf %74, %80 : vector<8x32xf32>
    %88 = arith.addf %86, %87 : vector<8x32xf32>
    %89 = math.tanh %88 : vector<8x32xf32>
    %90 = arith.mulf %85, %89 : vector<8x32xf32>
    %c2_i32 = arith.constant 2 : i32
    %91 = arith.index_cast %c2_i32 : i32 to index
    %c0_23 = arith.constant 0 : index
    %c0_24 = arith.constant 0 : index
    %c0_25 = arith.constant 0 : index
    %92 = vector.load %arg0[%91, %c0_23, %c0_24, %c0_25] : memref<8x4x8x32xf32, #tpu.memory_space<vmem>>, vector<1x4x8x32xf32>
    %93 = vector.shape_cast %92 : vector<1x4x8x32xf32> to vector<4x8x32xf32>
    %94 = vector.extract_strided_slice %93 {offsets = [0, 0, 0], sizes = [1, 8, 32], strides = [1, 1, 1]} : vector<4x8x32xf32> to vector<1x8x32xf32>
    %95 = vector.shape_cast %94 : vector<1x8x32xf32> to vector<8x32xf32>
    %cst_26 = arith.constant dense<0.000000e+00> : vector<8x32xf32>
    %96 = tpu.matmul %90, %2, %cst_26 {dimension_numbers = #tpu.dot_dimension_numbers<[1], [0], [0], [1], [0, 0, 1, 1], [], []>} : vector<8x32xf32>, vector<32x32xf32>, vector<8x32xf32> -> vector<8x32xf32>
    %97 = arith.addf %95, %96 : vector<8x32xf32>
    %98 = vector.extract_strided_slice %93 {offsets = [1, 0, 0], sizes = [1, 8, 32], strides = [1, 1, 1]} : vector<4x8x32xf32> to vector<1x8x32xf32>
    %99 = vector.shape_cast %98 : vector<1x8x32xf32> to vector<8x32xf32>
    %cst_27 = arith.constant dense<0.000000e+00> : vector<8x32xf32>
    %100 = tpu.matmul %90, %4, %cst_27 {dimension_numbers = #tpu.dot_dimension_numbers<[1], [0], [0], [1], [0, 0, 1, 1], [], []>} : vector<8x32xf32>, vector<32x32xf32>, vector<8x32xf32> -> vector<8x32xf32>
    %101 = arith.addf %99, %100 : vector<8x32xf32>
    %102 = vector.extract_strided_slice %93 {offsets = [2, 0, 0], sizes = [1, 8, 32], strides = [1, 1, 1]} : vector<4x8x32xf32> to vector<1x8x32xf32>
    %103 = vector.shape_cast %102 : vector<1x8x32xf32> to vector<8x32xf32>
    %cst_28 = arith.constant dense<0.000000e+00> : vector<8x32xf32>
    %104 = tpu.matmul %90, %6, %cst_28 {dimension_numbers = #tpu.dot_dimension_numbers<[1], [0], [0], [1], [0, 0, 1, 1], [], []>} : vector<8x32xf32>, vector<32x32xf32>, vector<8x32xf32> -> vector<8x32xf32>
    %105 = arith.addf %103, %104 : vector<8x32xf32>
    %106 = vector.extract_strided_slice %93 {offsets = [3, 0, 0], sizes = [1, 8, 32], strides = [1, 1, 1]} : vector<4x8x32xf32> to vector<1x8x32xf32>
    %107 = vector.shape_cast %106 : vector<1x8x32xf32> to vector<8x32xf32>
    %cst_29 = arith.constant dense<0.000000e+00> : vector<8x32xf32>
    %108 = tpu.matmul %90, %8, %cst_29 {dimension_numbers = #tpu.dot_dimension_numbers<[1], [0], [0], [1], [0, 0, 1, 1], [], []>} : vector<8x32xf32>, vector<32x32xf32>, vector<8x32xf32> -> vector<8x32xf32>
    %109 = arith.addf %107, %108 : vector<8x32xf32>
    %110 = arith.negf %97 : vector<8x32xf32>
    %111 = math.exp %110 : vector<8x32xf32>
    %cst_30 = arith.constant 1.000000e+00 : f32
    %112 = vector.broadcast %cst_30 : f32 to vector<8x32xf32>
    %113 = arith.addf %112, %111 : vector<8x32xf32>
    %114 = arith.divf %112, %113 : vector<8x32xf32>
    %115 = arith.negf %101 : vector<8x32xf32>
    %116 = math.exp %115 : vector<8x32xf32>
    %cst_31 = arith.constant 1.000000e+00 : f32
    %117 = vector.broadcast %cst_31 : f32 to vector<8x32xf32>
    %118 = arith.addf %117, %116 : vector<8x32xf32>
    %119 = arith.divf %117, %118 : vector<8x32xf32>
    %120 = math.tanh %105 : vector<8x32xf32>
    %121 = arith.negf %109 : vector<8x32xf32>
    %122 = math.exp %121 : vector<8x32xf32>
    %cst_32 = arith.constant 1.000000e+00 : f32
    %123 = vector.broadcast %cst_32 : f32 to vector<8x32xf32>
    %124 = arith.addf %123, %122 : vector<8x32xf32>
    %125 = arith.divf %123, %124 : vector<8x32xf32>
    %126 = arith.mulf %119, %88 : vector<8x32xf32>
    %127 = arith.mulf %114, %120 : vector<8x32xf32>
    %128 = arith.addf %126, %127 : vector<8x32xf32>
    %129 = math.tanh %128 : vector<8x32xf32>
    %130 = arith.mulf %125, %129 : vector<8x32xf32>
    %c3_i32 = arith.constant 3 : i32
    %131 = arith.index_cast %c3_i32 : i32 to index
    %c0_33 = arith.constant 0 : index
    %c0_34 = arith.constant 0 : index
    %c0_35 = arith.constant 0 : index
    %132 = vector.load %arg0[%131, %c0_33, %c0_34, %c0_35] : memref<8x4x8x32xf32, #tpu.memory_space<vmem>>, vector<1x4x8x32xf32>
    %133 = vector.shape_cast %132 : vector<1x4x8x32xf32> to vector<4x8x32xf32>
    %134 = vector.extract_strided_slice %133 {offsets = [0, 0, 0], sizes = [1, 8, 32], strides = [1, 1, 1]} : vector<4x8x32xf32> to vector<1x8x32xf32>
    %135 = vector.shape_cast %134 : vector<1x8x32xf32> to vector<8x32xf32>
    %cst_36 = arith.constant dense<0.000000e+00> : vector<8x32xf32>
    %136 = tpu.matmul %130, %2, %cst_36 {dimension_numbers = #tpu.dot_dimension_numbers<[1], [0], [0], [1], [0, 0, 1, 1], [], []>} : vector<8x32xf32>, vector<32x32xf32>, vector<8x32xf32> -> vector<8x32xf32>
    %137 = arith.addf %135, %136 : vector<8x32xf32>
    %138 = vector.extract_strided_slice %133 {offsets = [1, 0, 0], sizes = [1, 8, 32], strides = [1, 1, 1]} : vector<4x8x32xf32> to vector<1x8x32xf32>
    %139 = vector.shape_cast %138 : vector<1x8x32xf32> to vector<8x32xf32>
    %cst_37 = arith.constant dense<0.000000e+00> : vector<8x32xf32>
    %140 = tpu.matmul %130, %4, %cst_37 {dimension_numbers = #tpu.dot_dimension_numbers<[1], [0], [0], [1], [0, 0, 1, 1], [], []>} : vector<8x32xf32>, vector<32x32xf32>, vector<8x32xf32> -> vector<8x32xf32>
    %141 = arith.addf %139, %140 : vector<8x32xf32>
    %142 = vector.extract_strided_slice %133 {offsets = [2, 0, 0], sizes = [1, 8, 32], strides = [1, 1, 1]} : vector<4x8x32xf32> to vector<1x8x32xf32>
    %143 = vector.shape_cast %142 : vector<1x8x32xf32> to vector<8x32xf32>
    %cst_38 = arith.constant dense<0.000000e+00> : vector<8x32xf32>
    %144 = tpu.matmul %130, %6, %cst_38 {dimension_numbers = #tpu.dot_dimension_numbers<[1], [0], [0], [1], [0, 0, 1, 1], [], []>} : vector<8x32xf32>, vector<32x32xf32>, vector<8x32xf32> -> vector<8x32xf32>
    %145 = arith.addf %143, %144 : vector<8x32xf32>
    %146 = vector.extract_strided_slice %133 {offsets = [3, 0, 0], sizes = [1, 8, 32], strides = [1, 1, 1]} : vector<4x8x32xf32> to vector<1x8x32xf32>
    %147 = vector.shape_cast %146 : vector<1x8x32xf32> to vector<8x32xf32>
    %cst_39 = arith.constant dense<0.000000e+00> : vector<8x32xf32>
    %148 = tpu.matmul %130, %8, %cst_39 {dimension_numbers = #tpu.dot_dimension_numbers<[1], [0], [0], [1], [0, 0, 1, 1], [], []>} : vector<8x32xf32>, vector<32x32xf32>, vector<8x32xf32> -> vector<8x32xf32>
    %149 = arith.addf %147, %148 : vector<8x32xf32>
    %150 = arith.negf %137 : vector<8x32xf32>
    %151 = math.exp %150 : vector<8x32xf32>
    %cst_40 = arith.constant 1.000000e+00 : f32
    %152 = vector.broadcast %cst_40 : f32 to vector<8x32xf32>
    %153 = arith.addf %152, %151 : vector<8x32xf32>
    %154 = arith.divf %152, %153 : vector<8x32xf32>
    %155 = arith.negf %141 : vector<8x32xf32>
    %156 = math.exp %155 : vector<8x32xf32>
    %cst_41 = arith.constant 1.000000e+00 : f32
    %157 = vector.broadcast %cst_41 : f32 to vector<8x32xf32>
    %158 = arith.addf %157, %156 : vector<8x32xf32>
    %159 = arith.divf %157, %158 : vector<8x32xf32>
    %160 = math.tanh %145 : vector<8x32xf32>
    %161 = arith.negf %149 : vector<8x32xf32>
    %162 = math.exp %161 : vector<8x32xf32>
    %cst_42 = arith.constant 1.000000e+00 : f32
    %163 = vector.broadcast %cst_42 : f32 to vector<8x32xf32>
    %164 = arith.addf %163, %162 : vector<8x32xf32>
    %165 = arith.divf %163, %164 : vector<8x32xf32>
    %166 = arith.mulf %159, %128 : vector<8x32xf32>
    %167 = arith.mulf %154, %160 : vector<8x32xf32>
    %168 = arith.addf %166, %167 : vector<8x32xf32>
    %169 = math.tanh %168 : vector<8x32xf32>
    %170 = arith.mulf %165, %169 : vector<8x32xf32>
    %c4_i32 = arith.constant 4 : i32
    %171 = arith.index_cast %c4_i32 : i32 to index
    %c0_43 = arith.constant 0 : index
    %c0_44 = arith.constant 0 : index
    %c0_45 = arith.constant 0 : index
    %172 = vector.load %arg0[%171, %c0_43, %c0_44, %c0_45] : memref<8x4x8x32xf32, #tpu.memory_space<vmem>>, vector<1x4x8x32xf32>
    %173 = vector.shape_cast %172 : vector<1x4x8x32xf32> to vector<4x8x32xf32>
    %174 = vector.extract_strided_slice %173 {offsets = [0, 0, 0], sizes = [1, 8, 32], strides = [1, 1, 1]} : vector<4x8x32xf32> to vector<1x8x32xf32>
    %175 = vector.shape_cast %174 : vector<1x8x32xf32> to vector<8x32xf32>
    %cst_46 = arith.constant dense<0.000000e+00> : vector<8x32xf32>
    %176 = tpu.matmul %170, %2, %cst_46 {dimension_numbers = #tpu.dot_dimension_numbers<[1], [0], [0], [1], [0, 0, 1, 1], [], []>} : vector<8x32xf32>, vector<32x32xf32>, vector<8x32xf32> -> vector<8x32xf32>
    %177 = arith.addf %175, %176 : vector<8x32xf32>
    %178 = vector.extract_strided_slice %173 {offsets = [1, 0, 0], sizes = [1, 8, 32], strides = [1, 1, 1]} : vector<4x8x32xf32> to vector<1x8x32xf32>
    %179 = vector.shape_cast %178 : vector<1x8x32xf32> to vector<8x32xf32>
    %cst_47 = arith.constant dense<0.000000e+00> : vector<8x32xf32>
    %180 = tpu.matmul %170, %4, %cst_47 {dimension_numbers = #tpu.dot_dimension_numbers<[1], [0], [0], [1], [0, 0, 1, 1], [], []>} : vector<8x32xf32>, vector<32x32xf32>, vector<8x32xf32> -> vector<8x32xf32>
    %181 = arith.addf %179, %180 : vector<8x32xf32>
    %182 = vector.extract_strided_slice %173 {offsets = [2, 0, 0], sizes = [1, 8, 32], strides = [1, 1, 1]} : vector<4x8x32xf32> to vector<1x8x32xf32>
    %183 = vector.shape_cast %182 : vector<1x8x32xf32> to vector<8x32xf32>
    %cst_48 = arith.constant dense<0.000000e+00> : vector<8x32xf32>
    %184 = tpu.matmul %170, %6, %cst_48 {dimension_numbers = #tpu.dot_dimension_numbers<[1], [0], [0], [1], [0, 0, 1, 1], [], []>} : vector<8x32xf32>, vector<32x32xf32>, vector<8x32xf32> -> vector<8x32xf32>
    %185 = arith.addf %183, %184 : vector<8x32xf32>
    %186 = vector.extract_strided_slice %173 {offsets = [3, 0, 0], sizes = [1, 8, 32], strides = [1, 1, 1]} : vector<4x8x32xf32> to vector<1x8x32xf32>
    %187 = vector.shape_cast %186 : vector<1x8x32xf32> to vector<8x32xf32>
    %cst_49 = arith.constant dense<0.000000e+00> : vector<8x32xf32>
    %188 = tpu.matmul %170, %8, %cst_49 {dimension_numbers = #tpu.dot_dimension_numbers<[1], [0], [0], [1], [0, 0, 1, 1], [], []>} : vector<8x32xf32>, vector<32x32xf32>, vector<8x32xf32> -> vector<8x32xf32>
    %189 = arith.addf %187, %188 : vector<8x32xf32>
    %190 = arith.negf %177 : vector<8x32xf32>
    %191 = math.exp %190 : vector<8x32xf32>
    %cst_50 = arith.constant 1.000000e+00 : f32
    %192 = vector.broadcast %cst_50 : f32 to vector<8x32xf32>
    %193 = arith.addf %192, %191 : vector<8x32xf32>
    %194 = arith.divf %192, %193 : vector<8x32xf32>
    %195 = arith.negf %181 : vector<8x32xf32>
    %196 = math.exp %195 : vector<8x32xf32>
    %cst_51 = arith.constant 1.000000e+00 : f32
    %197 = vector.broadcast %cst_51 : f32 to vector<8x32xf32>
    %198 = arith.addf %197, %196 : vector<8x32xf32>
    %199 = arith.divf %197, %198 : vector<8x32xf32>
    %200 = math.tanh %185 : vector<8x32xf32>
    %201 = arith.negf %189 : vector<8x32xf32>
    %202 = math.exp %201 : vector<8x32xf32>
    %cst_52 = arith.constant 1.000000e+00 : f32
    %203 = vector.broadcast %cst_52 : f32 to vector<8x32xf32>
    %204 = arith.addf %203, %202 : vector<8x32xf32>
    %205 = arith.divf %203, %204 : vector<8x32xf32>
    %206 = arith.mulf %199, %168 : vector<8x32xf32>
    %207 = arith.mulf %194, %200 : vector<8x32xf32>
    %208 = arith.addf %206, %207 : vector<8x32xf32>
    %209 = math.tanh %208 : vector<8x32xf32>
    %210 = arith.mulf %205, %209 : vector<8x32xf32>
    %c5_i32 = arith.constant 5 : i32
    %211 = arith.index_cast %c5_i32 : i32 to index
    %c0_53 = arith.constant 0 : index
    %c0_54 = arith.constant 0 : index
    %c0_55 = arith.constant 0 : index
    %212 = vector.load %arg0[%211, %c0_53, %c0_54, %c0_55] : memref<8x4x8x32xf32, #tpu.memory_space<vmem>>, vector<1x4x8x32xf32>
    %213 = vector.shape_cast %212 : vector<1x4x8x32xf32> to vector<4x8x32xf32>
    %214 = vector.extract_strided_slice %213 {offsets = [0, 0, 0], sizes = [1, 8, 32], strides = [1, 1, 1]} : vector<4x8x32xf32> to vector<1x8x32xf32>
    %215 = vector.shape_cast %214 : vector<1x8x32xf32> to vector<8x32xf32>
    %cst_56 = arith.constant dense<0.000000e+00> : vector<8x32xf32>
    %216 = tpu.matmul %210, %2, %cst_56 {dimension_numbers = #tpu.dot_dimension_numbers<[1], [0], [0], [1], [0, 0, 1, 1], [], []>} : vector<8x32xf32>, vector<32x32xf32>, vector<8x32xf32> -> vector<8x32xf32>
    %217 = arith.addf %215, %216 : vector<8x32xf32>
    %218 = vector.extract_strided_slice %213 {offsets = [1, 0, 0], sizes = [1, 8, 32], strides = [1, 1, 1]} : vector<4x8x32xf32> to vector<1x8x32xf32>
    %219 = vector.shape_cast %218 : vector<1x8x32xf32> to vector<8x32xf32>
    %cst_57 = arith.constant dense<0.000000e+00> : vector<8x32xf32>
    %220 = tpu.matmul %210, %4, %cst_57 {dimension_numbers = #tpu.dot_dimension_numbers<[1], [0], [0], [1], [0, 0, 1, 1], [], []>} : vector<8x32xf32>, vector<32x32xf32>, vector<8x32xf32> -> vector<8x32xf32>
    %221 = arith.addf %219, %220 : vector<8x32xf32>
    %222 = vector.extract_strided_slice %213 {offsets = [2, 0, 0], sizes = [1, 8, 32], strides = [1, 1, 1]} : vector<4x8x32xf32> to vector<1x8x32xf32>
    %223 = vector.shape_cast %222 : vector<1x8x32xf32> to vector<8x32xf32>
    %cst_58 = arith.constant dense<0.000000e+00> : vector<8x32xf32>
    %224 = tpu.matmul %210, %6, %cst_58 {dimension_numbers = #tpu.dot_dimension_numbers<[1], [0], [0], [1], [0, 0, 1, 1], [], []>} : vector<8x32xf32>, vector<32x32xf32>, vector<8x32xf32> -> vector<8x32xf32>
    %225 = arith.addf %223, %224 : vector<8x32xf32>
    %226 = vector.extract_strided_slice %213 {offsets = [3, 0, 0], sizes = [1, 8, 32], strides = [1, 1, 1]} : vector<4x8x32xf32> to vector<1x8x32xf32>
    %227 = vector.shape_cast %226 : vector<1x8x32xf32> to vector<8x32xf32>
    %cst_59 = arith.constant dense<0.000000e+00> : vector<8x32xf32>
    %228 = tpu.matmul %210, %8, %cst_59 {dimension_numbers = #tpu.dot_dimension_numbers<[1], [0], [0], [1], [0, 0, 1, 1], [], []>} : vector<8x32xf32>, vector<32x32xf32>, vector<8x32xf32> -> vector<8x32xf32>
    %229 = arith.addf %227, %228 : vector<8x32xf32>
    %230 = arith.negf %217 : vector<8x32xf32>
    %231 = math.exp %230 : vector<8x32xf32>
    %cst_60 = arith.constant 1.000000e+00 : f32
    %232 = vector.broadcast %cst_60 : f32 to vector<8x32xf32>
    %233 = arith.addf %232, %231 : vector<8x32xf32>
    %234 = arith.divf %232, %233 : vector<8x32xf32>
    %235 = arith.negf %221 : vector<8x32xf32>
    %236 = math.exp %235 : vector<8x32xf32>
    %cst_61 = arith.constant 1.000000e+00 : f32
    %237 = vector.broadcast %cst_61 : f32 to vector<8x32xf32>
    %238 = arith.addf %237, %236 : vector<8x32xf32>
    %239 = arith.divf %237, %238 : vector<8x32xf32>
    %240 = math.tanh %225 : vector<8x32xf32>
    %241 = arith.negf %229 : vector<8x32xf32>
    %242 = math.exp %241 : vector<8x32xf32>
    %cst_62 = arith.constant 1.000000e+00 : f32
    %243 = vector.broadcast %cst_62 : f32 to vector<8x32xf32>
    %244 = arith.addf %243, %242 : vector<8x32xf32>
    %245 = arith.divf %243, %244 : vector<8x32xf32>
    %246 = arith.mulf %239, %208 : vector<8x32xf32>
    %247 = arith.mulf %234, %240 : vector<8x32xf32>
    %248 = arith.addf %246, %247 : vector<8x32xf32>
    %249 = math.tanh %248 : vector<8x32xf32>
    %250 = arith.mulf %245, %249 : vector<8x32xf32>
    %c6_i32 = arith.constant 6 : i32
    %251 = arith.index_cast %c6_i32 : i32 to index
    %c0_63 = arith.constant 0 : index
    %c0_64 = arith.constant 0 : index
    %c0_65 = arith.constant 0 : index
    %252 = vector.load %arg0[%251, %c0_63, %c0_64, %c0_65] : memref<8x4x8x32xf32, #tpu.memory_space<vmem>>, vector<1x4x8x32xf32>
    %253 = vector.shape_cast %252 : vector<1x4x8x32xf32> to vector<4x8x32xf32>
    %254 = vector.extract_strided_slice %253 {offsets = [0, 0, 0], sizes = [1, 8, 32], strides = [1, 1, 1]} : vector<4x8x32xf32> to vector<1x8x32xf32>
    %255 = vector.shape_cast %254 : vector<1x8x32xf32> to vector<8x32xf32>
    %cst_66 = arith.constant dense<0.000000e+00> : vector<8x32xf32>
    %256 = tpu.matmul %250, %2, %cst_66 {dimension_numbers = #tpu.dot_dimension_numbers<[1], [0], [0], [1], [0, 0, 1, 1], [], []>} : vector<8x32xf32>, vector<32x32xf32>, vector<8x32xf32> -> vector<8x32xf32>
    %257 = arith.addf %255, %256 : vector<8x32xf32>
    %258 = vector.extract_strided_slice %253 {offsets = [1, 0, 0], sizes = [1, 8, 32], strides = [1, 1, 1]} : vector<4x8x32xf32> to vector<1x8x32xf32>
    %259 = vector.shape_cast %258 : vector<1x8x32xf32> to vector<8x32xf32>
    %cst_67 = arith.constant dense<0.000000e+00> : vector<8x32xf32>
    %260 = tpu.matmul %250, %4, %cst_67 {dimension_numbers = #tpu.dot_dimension_numbers<[1], [0], [0], [1], [0, 0, 1, 1], [], []>} : vector<8x32xf32>, vector<32x32xf32>, vector<8x32xf32> -> vector<8x32xf32>
    %261 = arith.addf %259, %260 : vector<8x32xf32>
    %262 = vector.extract_strided_slice %253 {offsets = [2, 0, 0], sizes = [1, 8, 32], strides = [1, 1, 1]} : vector<4x8x32xf32> to vector<1x8x32xf32>
    %263 = vector.shape_cast %262 : vector<1x8x32xf32> to vector<8x32xf32>
    %cst_68 = arith.constant dense<0.000000e+00> : vector<8x32xf32>
    %264 = tpu.matmul %250, %6, %cst_68 {dimension_numbers = #tpu.dot_dimension_numbers<[1], [0], [0], [1], [0, 0, 1, 1], [], []>} : vector<8x32xf32>, vector<32x32xf32>, vector<8x32xf32> -> vector<8x32xf32>
    %265 = arith.addf %263, %264 : vector<8x32xf32>
    %266 = vector.extract_strided_slice %253 {offsets = [3, 0, 0], sizes = [1, 8, 32], strides = [1, 1, 1]} : vector<4x8x32xf32> to vector<1x8x32xf32>
    %267 = vector.shape_cast %266 : vector<1x8x32xf32> to vector<8x32xf32>
    %cst_69 = arith.constant dense<0.000000e+00> : vector<8x32xf32>
    %268 = tpu.matmul %250, %8, %cst_69 {dimension_numbers = #tpu.dot_dimension_numbers<[1], [0], [0], [1], [0, 0, 1, 1], [], []>} : vector<8x32xf32>, vector<32x32xf32>, vector<8x32xf32> -> vector<8x32xf32>
    %269 = arith.addf %267, %268 : vector<8x32xf32>
    %270 = arith.negf %257 : vector<8x32xf32>
    %271 = math.exp %270 : vector<8x32xf32>
    %cst_70 = arith.constant 1.000000e+00 : f32
    %272 = vector.broadcast %cst_70 : f32 to vector<8x32xf32>
    %273 = arith.addf %272, %271 : vector<8x32xf32>
    %274 = arith.divf %272, %273 : vector<8x32xf32>
    %275 = arith.negf %261 : vector<8x32xf32>
    %276 = math.exp %275 : vector<8x32xf32>
    %cst_71 = arith.constant 1.000000e+00 : f32
    %277 = vector.broadcast %cst_71 : f32 to vector<8x32xf32>
    %278 = arith.addf %277, %276 : vector<8x32xf32>
    %279 = arith.divf %277, %278 : vector<8x32xf32>
    %280 = math.tanh %265 : vector<8x32xf32>
    %281 = arith.negf %269 : vector<8x32xf32>
    %282 = math.exp %281 : vector<8x32xf32>
    %cst_72 = arith.constant 1.000000e+00 : f32
    %283 = vector.broadcast %cst_72 : f32 to vector<8x32xf32>
    %284 = arith.addf %283, %282 : vector<8x32xf32>
    %285 = arith.divf %283, %284 : vector<8x32xf32>
    %286 = arith.mulf %279, %248 : vector<8x32xf32>
    %287 = arith.mulf %274, %280 : vector<8x32xf32>
    %288 = arith.addf %286, %287 : vector<8x32xf32>
    %289 = math.tanh %288 : vector<8x32xf32>
    %290 = arith.mulf %285, %289 : vector<8x32xf32>
    %c7_i32 = arith.constant 7 : i32
    %291 = arith.index_cast %c7_i32 : i32 to index
    %c0_73 = arith.constant 0 : index
    %c0_74 = arith.constant 0 : index
    %c0_75 = arith.constant 0 : index
    %292 = vector.load %arg0[%291, %c0_73, %c0_74, %c0_75] : memref<8x4x8x32xf32, #tpu.memory_space<vmem>>, vector<1x4x8x32xf32>
    %293 = vector.shape_cast %292 : vector<1x4x8x32xf32> to vector<4x8x32xf32>
    %294 = vector.extract_strided_slice %293 {offsets = [0, 0, 0], sizes = [1, 8, 32], strides = [1, 1, 1]} : vector<4x8x32xf32> to vector<1x8x32xf32>
    %295 = vector.shape_cast %294 : vector<1x8x32xf32> to vector<8x32xf32>
    %cst_76 = arith.constant dense<0.000000e+00> : vector<8x32xf32>
    %296 = tpu.matmul %290, %2, %cst_76 {dimension_numbers = #tpu.dot_dimension_numbers<[1], [0], [0], [1], [0, 0, 1, 1], [], []>} : vector<8x32xf32>, vector<32x32xf32>, vector<8x32xf32> -> vector<8x32xf32>
    %297 = arith.addf %295, %296 : vector<8x32xf32>
    %298 = vector.extract_strided_slice %293 {offsets = [1, 0, 0], sizes = [1, 8, 32], strides = [1, 1, 1]} : vector<4x8x32xf32> to vector<1x8x32xf32>
    %299 = vector.shape_cast %298 : vector<1x8x32xf32> to vector<8x32xf32>
    %cst_77 = arith.constant dense<0.000000e+00> : vector<8x32xf32>
    %300 = tpu.matmul %290, %4, %cst_77 {dimension_numbers = #tpu.dot_dimension_numbers<[1], [0], [0], [1], [0, 0, 1, 1], [], []>} : vector<8x32xf32>, vector<32x32xf32>, vector<8x32xf32> -> vector<8x32xf32>
    %301 = arith.addf %299, %300 : vector<8x32xf32>
    %302 = vector.extract_strided_slice %293 {offsets = [2, 0, 0], sizes = [1, 8, 32], strides = [1, 1, 1]} : vector<4x8x32xf32> to vector<1x8x32xf32>
    %303 = vector.shape_cast %302 : vector<1x8x32xf32> to vector<8x32xf32>
    %cst_78 = arith.constant dense<0.000000e+00> : vector<8x32xf32>
    %304 = tpu.matmul %290, %6, %cst_78 {dimension_numbers = #tpu.dot_dimension_numbers<[1], [0], [0], [1], [0, 0, 1, 1], [], []>} : vector<8x32xf32>, vector<32x32xf32>, vector<8x32xf32> -> vector<8x32xf32>
    %305 = arith.addf %303, %304 : vector<8x32xf32>
    %306 = vector.extract_strided_slice %293 {offsets = [3, 0, 0], sizes = [1, 8, 32], strides = [1, 1, 1]} : vector<4x8x32xf32> to vector<1x8x32xf32>
    %307 = vector.shape_cast %306 : vector<1x8x32xf32> to vector<8x32xf32>
    %cst_79 = arith.constant dense<0.000000e+00> : vector<8x32xf32>
    %308 = tpu.matmul %290, %8, %cst_79 {dimension_numbers = #tpu.dot_dimension_numbers<[1], [0], [0], [1], [0, 0, 1, 1], [], []>} : vector<8x32xf32>, vector<32x32xf32>, vector<8x32xf32> -> vector<8x32xf32>
    %309 = arith.addf %307, %308 : vector<8x32xf32>
    %310 = arith.negf %297 : vector<8x32xf32>
    %311 = math.exp %310 : vector<8x32xf32>
    %cst_80 = arith.constant 1.000000e+00 : f32
    %312 = vector.broadcast %cst_80 : f32 to vector<8x32xf32>
    %313 = arith.addf %312, %311 : vector<8x32xf32>
    %314 = arith.divf %312, %313 : vector<8x32xf32>
    %315 = arith.negf %301 : vector<8x32xf32>
    %316 = math.exp %315 : vector<8x32xf32>
    %cst_81 = arith.constant 1.000000e+00 : f32
    %317 = vector.broadcast %cst_81 : f32 to vector<8x32xf32>
    %318 = arith.addf %317, %316 : vector<8x32xf32>
    %319 = arith.divf %317, %318 : vector<8x32xf32>
    %320 = math.tanh %305 : vector<8x32xf32>
    %321 = arith.negf %309 : vector<8x32xf32>
    %322 = math.exp %321 : vector<8x32xf32>
    %cst_82 = arith.constant 1.000000e+00 : f32
    %323 = vector.broadcast %cst_82 : f32 to vector<8x32xf32>
    %324 = arith.addf %323, %322 : vector<8x32xf32>
    %325 = arith.divf %323, %324 : vector<8x32xf32>
    %326 = arith.mulf %319, %288 : vector<8x32xf32>
    %327 = arith.mulf %314, %320 : vector<8x32xf32>
    %328 = arith.addf %326, %327 : vector<8x32xf32>
    %329 = math.tanh %328 : vector<8x32xf32>
    %330 = arith.mulf %325, %329 : vector<8x32xf32>
    %c8_i32 = arith.constant 8 : i32
    %c0_83 = arith.constant 0 : index
    %c0_84 = arith.constant 0 : index
    %331 = vector.load %arg2[%c0_83, %c0_84] : memref<32x4xf32, #tpu.memory_space<vmem>>, vector<32x4xf32>
    %cst_85 = arith.constant dense<0.000000e+00> : vector<8x4xf32>
    %332 = tpu.matmul %330, %331, %cst_85 {dimension_numbers = #tpu.dot_dimension_numbers<[1], [0], [0], [1], [0, 0, 1, 1], [], []>} : vector<8x32xf32>, vector<32x4xf32>, vector<8x4xf32> -> vector<8x4xf32>
    %c0_86 = arith.constant 0 : index
    %c0_87 = arith.constant 0 : index
    %333 = vector.load %arg3[%c0_86, %c0_87] : memref<1x4xf32, #tpu.memory_space<vmem>>, vector<1x4xf32>
    %334 = vector.broadcast %333 : vector<1x4xf32> to vector<8x4xf32>
    %335 = arith.addf %332, %334 : vector<8x4xf32>
    %c0_88 = arith.constant 0 : index
    %c0_89 = arith.constant 0 : index
    %336 = vector.load %arg4[%c0_88, %c0_89] : memref<8x4xf32, #tpu.memory_space<vmem>>, vector<8x4xf32>
    tpu.vector_store %arg4[%c0_88, %c0_89], %335 {strides = array<i32>} : memref<8x4xf32, #tpu.memory_space<vmem>>, vector<8x4xf32>,
    return
  }
}

</mosaic_0001>

<llo_original>
// kernel: tpu_custom_call.1
$region0: #{tpu_custom_call.1}
  #allocation0 [shape = 'u32[]', space=smem, size = 0x4, offset = 0x4, fixed_abs, tag = 'smem constant byte address 0x4 - core index']
  #allocation1 [shape = 'u32[72,128]{1,0:T(1,128)}', space=vmem, size = 0x9000, scoped, tag = 'internal scratch']
  %s0 = inlined_call_operand.hbm [shape: f32[8,4,8,32], index: 0, kind: input, shape index: {}]
  %s1 = inlined_call_operand.hbm [shape: f32[4,32,32], index: 1, kind: input, shape index: {}]
  %s2 = inlined_call_operand.vmem [shape: f32[32,4], index: 2, kind: input, shape index: {}]
  %s3 = inlined_call_operand.vmem [shape: f32[1,4], index: 3, kind: input, shape index: {}]
  %s4 = inlined_call_operand.vmem [shape: f32[8,4], index: 4, kind: output, shape index: {}]
  %s5 = sld [smem:[#allocation0]]
  $region34: #{tpu_custom_call.1} parent=0
    _
  %s7 = ssub.s32 1, %s5
  %s8 = scalar_select 0, %s7, %s5
  $region1: #{tpu_custom_call.1} parent=0
    #allocation2 [shape = 'u8[131072]{0}', space=vmem, size = 0x20000, scoped, tag = 'input window, operand 0, single buffered']
    #allocation3 [shape = 's32[1]{0}', space=sflag, size = 0x4, scoped, tag = 'scoped memory for tpu_custom_call.1']
    #allocation4 [shape = 'u8[65536]{0}', space=vmem, size = 0x10000, scoped, tag = 'input window, operand 1, single buffered']
    #allocation5 [shape = 's32[1]{0}', space=sflag, size = 0x4, scoped, tag = 'scoped memory for tpu_custom_call.1']
    %9 = vsyncpa [#allocation3], 0
    %10 = vsyncpa [#allocation5], 0
    // Predicated region
    $region2: #{tpu_custom_call.1} parent=1 // pred_check
      _
    $region3: #{tpu_custom_call.1} parent=1 // pred_check_branch
      %12 = sbr.rel (0) target = $region5
    $region4: #{tpu_custom_call.1} parent=1 // pred_region
      %14 = vsyncadd [#allocation3], 0
      %s15 = sshll.u32 %s0, 4
      %s16 = int_to_ptr.hbm [resolvable:$true] %s15
      %s17 = sshll.u32 [#allocation2], 4
      %s18 = int_to_ptr.vmem [resolvable:$true] %s17
      %23 = dma.hbm_to_vmem [thread:$0]  %s16, 4096, %s18, [#allocation3], 128, 128, 8
    $region5: #{tpu_custom_call.1} parent=1 // pred_fallthru
      _
    // Predicated region
    $region6: #{tpu_custom_call.1} parent=1 // pred_check
      _
    $region7: #{tpu_custom_call.1} parent=1 // pred_check_branch
      %25 = sbr.rel (0) target = $region9
    $region8: #{tpu_custom_call.1} parent=1 // pred_region
      %27 = vsyncadd [#allocation5], 0
      %s28 = sshll.u32 %s1, 4
      %s29 = int_to_ptr.hbm [resolvable:$true] %s28
      %s30 = sshll.u32 [#allocation4], 4
      %s31 = int_to_ptr.vmem [resolvable:$true] %s30
      %36 = dma.hbm_to_vmem [thread:$0]  %s29, 2048, %s31, [#allocation5], 128, 128, 8
    $region9: #{tpu_custom_call.1} parent=1 // pred_fallthru
      _
    // Predicated region
    $region10: #{tpu_custom_call.1} parent=1 // pred_check
      _
    $region11: #{tpu_custom_call.1} parent=1 // pred_check_branch
      %38 = sbr.rel (0) target = $region13
    $region12: #{tpu_custom_call.1} parent=1 // pred_region
      _
    $region13: #{tpu_custom_call.1} parent=1 // pred_fallthru
      _
    // Predicated region
    $region14: #{tpu_custom_call.1} parent=1 // pred_check
      _
    $region15: #{tpu_custom_call.1} parent=1 // pred_check_branch
      %40 = sbr.rel (0) target = $region17
    $region16: #{tpu_custom_call.1} parent=1 // pred_region
      _
    $region17: #{tpu_custom_call.1} parent=1 // pred_fallthru
      _
    // Predicated region
    $region18: #{tpu_custom_call.1} parent=1 // pred_check
      _
    $region19: #{tpu_custom_call.1} parent=1 // pred_check_branch
      %42 = sbr.rel (0) target = $region21
    $region20: #{tpu_custom_call.1} parent=1 // pred_region
      %44 = dma.done [#allocation3], 4096
    $region21: #{tpu_custom_call.1} parent=1 // pred_fallthru
      _
    // Predicated region
    $region22: #{tpu_custom_call.1} parent=1 // pred_check
      _
    $region23: #{tpu_custom_call.1} parent=1 // pred_check_branch
      %46 = sbr.rel (0) target = $region25
    $region24: #{tpu_custom_call.1} parent=1 // pred_region
      %48 = dma.done [#allocation5], 2048
    $region25: #{tpu_custom_call.1} parent=1 // pred_fallthru
      _
    %v49 = vld [vmem:[#allocation4] sm:$0xff]
    %v50 = vld [vmem:[#allocation4 + $0x8] sm:$0xff]
    %v51 = vld [vmem:[#allocation4 + $0x10] sm:$0xff]
    %v52 = vld [vmem:[#allocation4 + $0x18] sm:$0xff]
    %v53 = vld [vmem:[#allocation4 + $0x20] sm:$0xff]
    %v54 = vld [vmem:[#allocation4 + $0x28] sm:$0xff]
    %v55 = vld [vmem:[#allocation4 + $0x30] sm:$0xff]
    %v56 = vld [vmem:[#allocation4 + $0x38] sm:$0xff]
    %v57 = vld [vmem:[#allocation4 + $0x40] sm:$0xff]
    %v58 = vld [vmem:[#allocation4 + $0x48] sm:$0xff]
    %v59 = vld [vmem:[#allocation4 + $0x50] sm:$0xff]
    %v60 = vld [vmem:[#allocation4 + $0x58] sm:$0xff]
    %v61 = vld [vmem:[#allocation4 + $0x60] sm:$0xff]
    %v62 = vld [vmem:[#allocation4 + $0x68] sm:$0xff]
    %v63 = vld [vmem:[#allocation4 + $0x70] sm:$0xff]
    %v64 = vld [vmem:[#allocation4 + $0x78] sm:$0xff]
    %v65 = vld [vmem:[#allocation2] sm:$0xff]
    %v66 = vld [vmem:[#allocation2 + $0x8] sm:$0xff]
    %v67 = vld [vmem:[#allocation2 + $0x10] sm:$0xff]
    %v68 = vld [vmem:[#allocation2 + $0x18] sm:$0xff]
    %vm69 = vcmask 261120
    %v71 = vsel %vm69, 0.0, 0
    %73 = vmatpush.msra.mxu0 0.0
    %74 = vmatpush.msra.mxu0 0.0
    %75 = vmatpush.msra.mxu0 0.0
    %76 = vmatpush.msra.mxu0 0.0
    %77 = vmatpush.msra.mxu0 0.0
    %78 = vmatpush.msra.mxu0 0.0
    %79 = vmatpush.msra.mxu0 0.0
    %80 = vmatpush.msra.mxu0 0.0
    %81 = vmatpush.msra.mxu0 0.0
    %82 = vmatpush.msra.mxu0 0.0
    %83 = vmatpush.msra.mxu0 0.0
    %84 = vmatpush.msra.mxu0 0.0
    %85 = vmatpush.msra.mxu0 %v52
    %86 = vmatpush.msra.mxu0 %v51
    %87 = vmatpush.msra.mxu0 %v50
    %88 = vmatpush.msra.mxu0 %v49
    %89 = vmatmul.f32.gmra.mxu0 %v71
    %v90 = vpop.f32.mrf.mxu0
    %v91 = vadd.f32 0.0, %v90
    %92 = vdwg.mxu0
    %v93 = vadd.f32 %v65, %v91
    %94 = vmatpush.msra.mxu0 0.0
    %95 = vmatpush.msra.mxu0 0.0
    %96 = vmatpush.msra.mxu0 0.0
    %97 = vmatpush.msra.mxu0 0.0
    %98 = vmatpush.msra.mxu0 0.0
    %99 = vmatpush.msra.mxu0 0.0
    %100 = vmatpush.msra.mxu0 0.0
    %101 = vmatpush.msra.mxu0 0.0
    %102 = vmatpush.msra.mxu0 0.0
    %103 = vmatpush.msra.mxu0 0.0
    %104 = vmatpush.msra.mxu0 0.0
    %105 = vmatpush.msra.mxu0 0.0
    %106 = vmatpush.msra.mxu0 %v56
    %107 = vmatpush.msra.mxu0 %v55
    %108 = vmatpush.msra.mxu0 %v54
    %109 = vmatpush.msra.mxu0 %v53
    %110 = vmatmul.f32.gmra.mxu0 %v71
    %v111 = vpop.f32.mrf.mxu0
    %v112 = vadd.f32 0.0, %v111
    %113 = vdwg.mxu0
    %v114 = vadd.f32 %v66, %v112
    %115 = vmatpush.msra.mxu0 0.0
    %116 = vmatpush.msra.mxu0 0.0
    %117 = vmatpush.msra.mxu0 0.0
    %118 = vmatpush.msra.mxu0 0.0
    %119 = vmatpush.msra.mxu0 0.0
    %120 = vmatpush.msra.mxu0 0.0
    %121 = vmatpush.msra.mxu0 0.0
    %122 = vmatpush.msra.mxu0 0.0
    %123 = vmatpush.msra.mxu0 0.0
    %124 = vmatpush.msra.mxu0 0.0
    %125 = vmatpush.msra.mxu0 0.0
    %126 = vmatpush.msra.mxu0 0.0
    %127 = vmatpush.msra.mxu0 %v60
    %128 = vmatpush.msra.mxu0 %v59
    %129 = vmatpush.msra.mxu0 %v58
    %130 = vmatpush.msra.mxu0 %v57
    %131 = vmatmul.f32.gmra.mxu0 %v71
    %v132 = vpop.f32.mrf.mxu0
    %v133 = vadd.f32 0.0, %v132
    %134 = vdwg.mxu0
    %v135 = vadd.f32 %v67, %v133
    %136 = vmatpush.msra.mxu0 0.0
    %137 = vmatpush.msra.mxu0 0.0
    %138 = vmatpush.msra.mxu0 0.0
    %139 = vmatpush.msra.mxu0 0.0
    %140 = vmatpush.msra.mxu0 0.0
    %141 = vmatpush.msra.mxu0 0.0
    %142 = vmatpush.msra.mxu0 0.0
    %143 = vmatpush.msra.mxu0 0.0
    %144 = vmatpush.msra.mxu0 0.0
    %145 = vmatpush.msra.mxu0 0.0
    %146 = vmatpush.msra.mxu0 0.0
    %147 = vmatpush.msra.mxu0 0.0
    %148 = vmatpush.msra.mxu0 %v64
    %149 = vmatpush.msra.mxu0 %v63
    %150 = vmatpush.msra.mxu0 %v62
    %151 = vmatpush.msra.mxu0 %v61
    %152 = vmatmul.f32.gmra.mxu0 %v71
    %v153 = vpop.f32.mrf.mxu0
    %v154 = vadd.f32 0.0, %v153
    %155 = vdwg.mxu0
    %v156 = vadd.f32 %v68, %v154
    %v157 = vxor.u32 %v93, 2147483648
    %v158 = vmul.f32 %v157, 1.442695
    %v159 = vpow.pop %v158
    %v160 = vadd.f32 %v159, 1.0
    %v161 = vrcp.pop %v160
    %v162 = vmul.f32 %v160, %v161
    %v163 = vsub.f32 1.0, %v162
    %v164 = vmul.f32 %v161, %v163
    %v165 = vadd.f32 %v161, %v164
    %vm166 = vweird.f32 %v160
    %vm167 = vweird.f32 %v161
    %vm168 = vmor %vm166, %vm167
    %v169 = vsel %vm168, %v161, %v165
    %v170 = vand.u32 2147483647, %v160
    %vm171 = vcmp.eq.f32.partialorder %v170, 8.507059e+37
    %v172 = vand.u32 %v160, 2147483648
    %v173 = vor.u32 1.1754944e-38, %v172
    %v174 = vsel %vm171, %v173, %v169
    %v175 = vmul.f32 1.0, %v174
    %v176 = vxor.u32 %v114, 2147483648
    %v177 = vmul.f32 %v176, 1.442695
    %v178 = vpow.pop %v177
    %v179 = vadd.f32 %v178, 1.0
    %v180 = vrcp.pop %v179
    %v181 = vmul.f32 %v179, %v180
    %v182 = vsub.f32 1.0, %v181
    %v183 = vmul.f32 %v180, %v182
    %v184 = vadd.f32 %v180, %v183
    %vm185 = vweird.f32 %v179
    %vm186 = vweird.f32 %v180
    %vm187 = vmor %vm185, %vm186
    %v188 = vsel %vm187, %v180, %v184
    %v189 = vand.u32 2147483647, %v179
    %vm190 = vcmp.eq.f32.partialorder %v189, 8.507059e+37
    %v191 = vand.u32 %v179, 2147483648
    %v192 = vor.u32 1.1754944e-38, %v191
    %v193 = vsel %vm190, %v192, %v188
    %v194 = vmul.f32 1.0, %v193
    %v195 = vtanh.pop %v135
    %v196 = vxor.u32 %v156, 2147483648
    %v197 = vmul.f32 %v196, 1.442695
    %v198 = vpow.pop %v197
    %v199 = vadd.f32 %v198, 1.0
    %v200 = vrcp.pop %v199
    %v201 = vmul.f32 %v199, %v200
    %v202 = vsub.f32 1.0, %v201
    %v203 = vmul.f32 %v200, %v202
    %v204 = vadd.f32 %v200, %v203
    %vm205 = vweird.f32 %v199
    %vm206 = vweird.f32 %v200
    %vm207 = vmor %vm205, %vm206
    %v208 = vsel %vm207, %v200, %v204
    %v209 = vand.u32 2147483647, %v199
    %vm210 = vcmp.eq.f32.partialorder %v209, 8.507059e+37
    %v211 = vand.u32 %v199, 2147483648
    %v212 = vor.u32 1.1754944e-38, %v211
    %v213 = vsel %vm210, %v212, %v208
    %v214 = vmul.f32 1.0, %v213
    %v215 = vmul.f32 %v194, 0.0
    %v216 = vmul.f32 %v175, %v195
    %v217 = vadd.f32 %v215, %v216
    %v218 = vtanh.pop %v217
    %v219 = vmul.f32 %v214, %v218
    %s220 = scalar_lea.vmem [#allocation2], 32
    %v221 = vld [vmem:[%s220] sm:$0xff]
    %v222 = vld [vmem:[%s220 + $0x8] sm:$0xff]
    %v223 = vld [vmem:[%s220 + $0x10] sm:$0xff]
    %v224 = vld [vmem:[%s220 + $0x18] sm:$0xff]
    %v226 = vsel %vm69, %v219, 0
    %228 = vmatpush.msra.mxu0 0.0
    %229 = vmatpush.msra.mxu0 0.0
    %230 = vmatpush.msra.mxu0 0.0
    %231 = vmatpush.msra.mxu0 0.0
    %232 = vmatpush.msra.mxu0 0.0
    %233 = vmatpush.msra.mxu0 0.0
    %234 = vmatpush.msra.mxu0 0.0
    %235 = vmatpush.msra.mxu0 0.0
    %236 = vmatpush.msra.mxu0 0.0
    %237 = vmatpush.msra.mxu0 0.0
    %238 = vmatpush.msra.mxu0 0.0
    %239 = vmatpush.msra.mxu0 0.0
    %240 = vmatpush.msra.mxu0 %v52
    %241 = vmatpush.msra.mxu0 %v51
    %242 = vmatpush.msra.mxu0 %v50
    %243 = vmatpush.msra.mxu0 %v49
    %244 = vmatmul.f32.gmra.mxu0 %v226
    %v245 = vpop.f32.mrf.mxu0
    %v246 = vadd.f32 0.0, %v245
    %247 = vdwg.mxu0
    %v248 = vadd.f32 %v221, %v246
    %249 = vmatpush.msra.mxu0 0.0
    %250 = vmatpush.msra.mxu0 0.0
    %251 = vmatpush.msra.mxu0 0.0
    %252 = vmatpush.msra.mxu0 0.0
    %253 = vmatpush.msra.mxu0 0.0
    %254 = vmatpush.msra.mxu0 0.0
    %255 = vmatpush.msra.mxu0 0.0
    %256 = vmatpush.msra.mxu0 0.0
    %257 = vmatpush.msra.mxu0 0.0
    %258 = vmatpush.msra.mxu0 0.0
    %259 = vmatpush.msra.mxu0 0.0
    %260 = vmatpush.msra.mxu0 0.0
    %261 = vmatpush.msra.mxu0 %v56
    %262 = vmatpush.msra.mxu0 %v55
    %263 = vmatpush.msra.mxu0 %v54
    %264 = vmatpush.msra.mxu0 %v53
    %265 = vmatmul.f32.gmra.mxu0 %v226
    %v266 = vpop.f32.mrf.mxu0
    %v267 = vadd.f32 0.0, %v266
    %268 = vdwg.mxu0
    %v269 = vadd.f32 %v222, %v267
    %270 = vmatpush.msra.mxu0 0.0
    %271 = vmatpush.msra.mxu0 0.0
    %272 = vmatpush.msra.mxu0 0.0
    %273 = vmatpush.msra.mxu0 0.0
    %274 = vmatpush.msra.mxu0 0.0
    %275 = vmatpush.msra.mxu0 0.0
    %276 = vmatpush.msra.mxu0 0.0
    %277 = vmatpush.msra.mxu0 0.0
    %278 = vmatpush.msra.mxu0 0.0
    %279 = vmatpush.msra.mxu0 0.0
    %280 = vmatpush.msra.mxu0 0.0
    %281 = vmatpush.msra.mxu0 0.0
    %282 = vmatpush.msra.mxu0 %v60
    %283 = vmatpush.msra.mxu0 %v59
    %284 = vmatpush.msra.mxu0 %v58
    %285 = vmatpush.msra.mxu0 %v57
    %286 = vmatmul.f32.gmra.mxu0 %v226
    %v287 = vpop.f32.mrf.mxu0
    %v288 = vadd.f32 0.0, %v287
    %289 = vdwg.mxu0
    %v290 = vadd.f32 %v223, %v288
    %291 = vmatpush.msra.mxu0 0.0
    %292 = vmatpush.msra.mxu0 0.0
    %293 = vmatpush.msra.mxu0 0.0
    %294 = vmatpush.msra.mxu0 0.0
    %295 = vmatpush.msra.mxu0 0.0
    %296 = vmatpush.msra.mxu0 0.0
    %297 = vmatpush.msra.mxu0 0.0
    %298 = vmatpush.msra.mxu0 0.0
    %299 = vmatpush.msra.mxu0 0.0
    %300 = vmatpush.msra.mxu0 0.0
    %301 = vmatpush.msra.mxu0 0.0
    %302 = vmatpush.msra.mxu0 0.0
    %303 = vmatpush.msra.mxu0 %v64
    %304 = vmatpush.msra.mxu0 %v63
    %305 = vmatpush.msra.mxu0 %v62
    %306 = vmatpush.msra.mxu0 %v61
    %307 = vmatmul.f32.gmra.mxu0 %v226
    %v308 = vpop.f32.mrf.mxu0
    %v309 = vadd.f32 0.0, %v308
    %310 = vdwg.mxu0
    %v311 = vadd.f32 %v224, %v309
    %v312 = vxor.u32 %v248, 2147483648
    %v313 = vmul.f32 %v312, 1.442695
    %v314 = vpow.pop %v313
    %v315 = vadd.f32 %v314, 1.0
    %v316 = vrcp.pop %v315
    %v317 = vmul.f32 %v315, %v316
    %v318 = vsub.f32 1.0, %v317
    %v319 = vmul.f32 %v316, %v318
    %v320 = vadd.f32 %v316, %v319
    %vm321 = vweird.f32 %v315
    %vm322 = vweird.f32 %v316
    %vm323 = vmor %vm321, %vm322
    %v324 = vsel %vm323, %v316, %v320
    %v325 = vand.u32 2147483647, %v315
    %vm326 = vcmp.eq.f32.partialorder %v325, 8.507059e+37
    %v327 = vand.u32 %v315, 2147483648
    %v328 = vor.u32 1.1754944e-38, %v327
    %v329 = vsel %vm326, %v328, %v324
    %v330 = vmul.f32 1.0, %v329
    %v331 = vxor.u32 %v269, 2147483648
    %v332 = vmul.f32 %v331, 1.442695
    %v333 = vpow.pop %v332
    %v334 = vadd.f32 %v333, 1.0
    %v335 = vrcp.pop %v334
    %v336 = vmul.f32 %v334, %v335
    %v337 = vsub.f32 1.0, %v336
    %v338 = vmul.f32 %v335, %v337
    %v339 = vadd.f32 %v335, %v338
    %vm340 = vweird.f32 %v334
    %vm341 = vweird.f32 %v335
    %vm342 = vmor %vm340, %vm341
    %v343 = vsel %vm342, %v335, %v339
    %v344 = vand.u32 2147483647, %v334
    %vm345 = vcmp.eq.f32.partialorder %v344, 8.507059e+37
    %v346 = vand.u32 %v334, 2147483648
    %v347 = vor.u32 1.1754944e-38, %v346
    %v348 = vsel %vm345, %v347, %v343
    %v349 = vmul.f32 1.0, %v348
    %v350 = vtanh.pop %v290
    %v351 = vxor.u32 %v311, 2147483648
    %v352 = vmul.f32 %v351, 1.442695
    %v353 = vpow.pop %v352
    %v354 = vadd.f32 %v353, 1.0
    %v355 = vrcp.pop %v354
    %v356 = vmul.f32 %v354, %v355
    %v357 = vsub.f32 1.0, %v356
    %v358 = vmul.f32 %v355, %v357
    %v359 = vadd.f32 %v355, %v358
    %vm360 = vweird.f32 %v354
    %vm361 = vweird.f32 %v355
    %vm362 = vmor %vm360, %vm361
    %v363 = vsel %vm362, %v355, %v359
    %v364 = vand.u32 2147483647, %v354
    %vm365 = vcmp.eq.f32.partialorder %v364, 8.507059e+37
    %v366 = vand.u32 %v354, 2147483648
    %v367 = vor.u32 1.1754944e-38, %v366
    %v368 = vsel %vm365, %v367, %v363
    %v369 = vmul.f32 1.0, %v368
    %v370 = vmul.f32 %v349, %v217
    %v371 = vmul.f32 %v330, %v350
    %v372 = vadd.f32 %v370, %v371
    %v373 = vtanh.pop %v372
    %v374 = vmul.f32 %v369, %v373
    %s375 = scalar_lea.vmem [#allocation2], 64
    %v376 = vld [vmem:[%s375] sm:$0xff]
    %v377 = vld [vmem:[%s375 + $0x8] sm:$0xff]
    %v378 = vld [vmem:[%s375 + $0x10] sm:$0xff]
    %v379 = vld [vmem:[%s375 + $0x18] sm:$0xff]
    %v381 = vsel %vm69, %v374, 0
    %383 = vmatpush.msra.mxu0 0.0
    %384 = vmatpush.msra.mxu0 0.0
    %385 = vmatpush.msra.mxu0 0.0
    %386 = vmatpush.msra.mxu0 0.0
    %387 = vmatpush.msra.mxu0 0.0
    %388 = vmatpush.msra.mxu0 0.0
    %389 = vmatpush.msra.mxu0 0.0
    %390 = vmatpush.msra.mxu0 0.0
    %391 = vmatpush.msra.mxu0 0.0
    %392 = vmatpush.msra.mxu0 0.0
    %393 = vmatpush.msra.mxu0 0.0
    %394 = vmatpush.msra.mxu0 0.0
    %395 = vmatpush.msra.mxu0 %v52
    %396 = vmatpush.msra.mxu0 %v51
    %397 = vmatpush.msra.mxu0 %v50
    %398 = vmatpush.msra.mxu0 %v49
    %399 = vmatmul.f32.gmra.mxu0 %v381
    %v400 = vpop.f32.mrf.mxu0
    %v401 = vadd.f32 0.0, %v400
    %402 = vdwg.mxu0
    %v403 = vadd.f32 %v376, %v401
    %404 = vmatpush.msra.mxu0 0.0
    %405 = vmatpush.msra.mxu0 0.0
    %406 = vmatpush.msra.mxu0 0.0
    %407 = vmatpush.msra.mxu0 0.0
    %408 = vmatpush.msra.mxu0 0.0
    %409 = vmatpush.msra.mxu0 0.0
    %410 = vmatpush.msra.mxu0 0.0
    %411 = vmatpush.msra.mxu0 0.0
    %412 = vmatpush.msra.mxu0 0.0
    %413 = vmatpush.msra.mxu0 0.0
    %414 = vmatpush.msra.mxu0 0.0
    %415 = vmatpush.msra.mxu0 0.0
    %416 = vmatpush.msra.mxu0 %v56
    %417 = vmatpush.msra.mxu0 %v55
    %418 = vmatpush.msra.mxu0 %v54
    %419 = vmatpush.msra.mxu0 %v53
    %420 = vmatmul.f32.gmra.mxu0 %v381
    %v421 = vpop.f32.mrf.mxu0
    %v422 = vadd.f32 0.0, %v421
    %423 = vdwg.mxu0
    %v424 = vadd.f32 %v377, %v422
    %425 = vmatpush.msra.mxu0 0.0
    %426 = vmatpush.msra.mxu0 0.0
    %427 = vmatpush.msra.mxu0 0.0
    %428 = vmatpush.msra.mxu0 0.0
    %429 = vmatpush.msra.mxu0 0.0
    %430 = vmatpush.msra.mxu0 0.0
    %431 = vmatpush.msra.mxu0 0.0
    %432 = vmatpush.msra.mxu0 0.0
    %433 = vmatpush.msra.mxu0 0.0
    %434 = vmatpush.msra.mxu0 0.0
    %435 = vmatpush.msra.mxu0 0.0
    %436 = vmatpush.msra.mxu0 0.0
    %437 = vmatpush.msra.mxu0 %v60
    %438 = vmatpush.msra.mxu0 %v59
    %439 = vmatpush.msra.mxu0 %v58
    %440 = vmatpush.msra.mxu0 %v57
    %441 = vmatmul.f32.gmra.mxu0 %v381
    %v442 = vpop.f32.mrf.mxu0
    %v443 = vadd.f32 0.0, %v442
    %444 = vdwg.mxu0
    %v445 = vadd.f32 %v378, %v443
    %446 = vmatpush.msra.mxu0 0.0
    %447 = vmatpush.msra.mxu0 0.0
    %448 = vmatpush.msra.mxu0 0.0
    %449 = vmatpush.msra.mxu0 0.0
    %450 = vmatpush.msra.mxu0 0.0
    %451 = vmatpush.msra.mxu0 0.0
    %452 = vmatpush.msra.mxu0 0.0
    %453 = vmatpush.msra.mxu0 0.0
    %454 = vmatpush.msra.mxu0 0.0
    %455 = vmatpush.msra.mxu0 0.0
    %456 = vmatpush.msra.mxu0 0.0
    %457 = vmatpush.msra.mxu0 0.0
    %458 = vmatpush.msra.mxu0 %v64
    %459 = vmatpush.msra.mxu0 %v63
    %460 = vmatpush.msra.mxu0 %v62
    %461 = vmatpush.msra.mxu0 %v61
    %462 = vmatmul.f32.gmra.mxu0 %v381
    %v463 = vpop.f32.mrf.mxu0
    %v464 = vadd.f32 0.0, %v463
    %465 = vdwg.mxu0
    %v466 = vadd.f32 %v379, %v464
    %v467 = vxor.u32 %v403, 2147483648
    %v468 = vmul.f32 %v467, 1.442695
    %v469 = vpow.pop %v468
    %v470 = vadd.f32 %v469, 1.0
    %v471 = vrcp.pop %v470
    %v472 = vmul.f32 %v470, %v471
    %v473 = vsub.f32 1.0, %v472
    %v474 = vmul.f32 %v471, %v473
    %v475 = vadd.f32 %v471, %v474
    %vm476 = vweird.f32 %v470
    %vm477 = vweird.f32 %v471
    %vm478 = vmor %vm476, %vm477
    %v479 = vsel %vm478, %v471, %v475
    %v480 = vand.u32 2147483647, %v470
    %vm481 = vcmp.eq.f32.partialorder %v480, 8.507059e+37
    %v482 = vand.u32 %v470, 2147483648
    %v483 = vor.u32 1.1754944e-38, %v482
    %v484 = vsel %vm481, %v483, %v479
    %v485 = vmul.f32 1.0, %v484
    %v486 = vxor.u32 %v424, 2147483648
    %v487 = vmul.f32 %v486, 1.442695
    %v488 = vpow.pop %v487
    %v489 = vadd.f32 %v488, 1.0
    %v490 = vrcp.pop %v489
    %v491 = vmul.f32 %v489, %v490
    %v492 = vsub.f32 1.0, %v491
    %v493 = vmul.f32 %v490, %v492
    %v494 = vadd.f32 %v490, %v493
    %vm495 = vweird.f32 %v489
    %vm496 = vweird.f32 %v490
    %vm497 = vmor %vm495, %vm496
    %v498 = vsel %vm497, %v490, %v494
    %v499 = vand.u32 2147483647, %v489
    %vm500 = vcmp.eq.f32.partialorder %v499, 8.507059e+37
    %v501 = vand.u32 %v489, 2147483648
    %v502 = vor.u32 1.1754944e-38, %v501
    %v503 = vsel %vm500, %v502, %v498
    %v504 = vmul.f32 1.0, %v503
    %v505 = vtanh.pop %v445
    %v506 = vxor.u32 %v466, 2147483648
    %v507 = vmul.f32 %v506, 1.442695
    %v508 = vpow.pop %v507
    %v509 = vadd.f32 %v508, 1.0
    %v510 = vrcp.pop %v509
    %v511 = vmul.f32 %v509, %v510
    %v512 = vsub.f32 1.0, %v511
    %v513 = vmul.f32 %v510, %v512
    %v514 = vadd.f32 %v510, %v513
    %vm515 = vweird.f32 %v509
    %vm516 = vweird.f32 %v510
    %vm517 = vmor %vm515, %vm516
    %v518 = vsel %vm517, %v510, %v514
    %v519 = vand.u32 2147483647, %v509
    %vm520 = vcmp.eq.f32.partialorder %v519, 8.507059e+37
    %v521 = vand.u32 %v509, 2147483648
    %v522 = vor.u32 1.1754944e-38, %v521
    %v523 = vsel %vm520, %v522, %v518
    %v524 = vmul.f32 1.0, %v523
    %v525 = vmul.f32 %v504, %v372
    %v526 = vmul.f32 %v485, %v505
    %v527 = vadd.f32 %v525, %v526
    %v528 = vtanh.pop %v527
    %v529 = vmul.f32 %v524, %v528
    %s530 = scalar_lea.vmem [#allocation2], 96
    %v531 = vld [vmem:[%s530] sm:$0xff]
    %v532 = vld [vmem:[%s530 + $0x8] sm:$0xff]
    %v533 = vld [vmem:[%s530 + $0x10] sm:$0xff]
    %v534 = vld [vmem:[%s530 + $0x18] sm:$0xff]
    %v536 = vsel %vm69, %v529, 0
    %538 = vmatpush.msra.mxu0 0.0
    %539 = vmatpush.msra.mxu0 0.0
    %540 = vmatpush.msra.mxu0 0.0
    %541 = vmatpush.msra.mxu0 0.0
    %542 = vmatpush.msra.mxu0 0.0
    %543 = vmatpush.msra.mxu0 0.0
    %544 = vmatpush.msra.mxu0 0.0
    %545 = vmatpush.msra.mxu0 0.0
    %546 = vmatpush.msra.mxu0 0.0
    %547 = vmatpush.msra.mxu0 0.0
    %548 = vmatpush.msra.mxu0 0.0
    %549 = vmatpush.msra.mxu0 0.0
    %550 = vmatpush.msra.mxu0 %v52
    %551 = vmatpush.msra.mxu0 %v51
    %552 = vmatpush.msra.mxu0 %v50
    %553 = vmatpush.msra.mxu0 %v49
    %554 = vmatmul.f32.gmra.mxu0 %v536
    %v555 = vpop.f32.mrf.mxu0
    %v556 = vadd.f32 0.0, %v555
    %557 = vdwg.mxu0
    %v558 = vadd.f32 %v531, %v556
    %559 = vmatpush.msra.mxu0 0.0
    %560 = vmatpush.msra.mxu0 0.0
    %561 = vmatpush.msra.mxu0 0.0
    %562 = vmatpush.msra.mxu0 0.0
    %563 = vmatpush.msra.mxu0 0.0
    %564 = vmatpush.msra.mxu0 0.0
    %565 = vmatpush.msra.mxu0 0.0
    %566 = vmatpush.msra.mxu0 0.0
    %567 = vmatpush.msra.mxu0 0.0
    %568 = vmatpush.msra.mxu0 0.0
    %569 = vmatpush.msra.mxu0 0.0
    %570 = vmatpush.msra.mxu0 0.0
    %571 = vmatpush.msra.mxu0 %v56
    %572 = vmatpush.msra.mxu0 %v55
    %573 = vmatpush.msra.mxu0 %v54
    %574 = vmatpush.msra.mxu0 %v53
    %575 = vmatmul.f32.gmra.mxu0 %v536
    %v576 = vpop.f32.mrf.mxu0
    %v577 = vadd.f32 0.0, %v576
    %578 = vdwg.mxu0
    %v579 = vadd.f32 %v532, %v577
    %580 = vmatpush.msra.mxu0 0.0
    %581 = vmatpush.msra.mxu0 0.0
    %582 = vmatpush.msra.mxu0 0.0
    %583 = vmatpush.msra.mxu0 0.0
    %584 = vmatpush.msra.mxu0 0.0
    %585 = vmatpush.msra.mxu0 0.0
    %586 = vmatpush.msra.mxu0 0.0
    %587 = vmatpush.msra.mxu0 0.0
    %588 = vmatpush.msra.mxu0 0.0
    %589 = vmatpush.msra.mxu0 0.0
    %590 = vmatpush.msra.mxu0 0.0
    %591 = vmatpush.msra.mxu0 0.0
    %592 = vmatpush.msra.mxu0 %v60
    %593 = vmatpush.msra.mxu0 %v59
    %594 = vmatpush.msra.mxu0 %v58
    %595 = vmatpush.msra.mxu0 %v57
    %596 = vmatmul.f32.gmra.mxu0 %v536
    %v597 = vpop.f32.mrf.mxu0
    %v598 = vadd.f32 0.0, %v597
    %599 = vdwg.mxu0
    %v600 = vadd.f32 %v533, %v598
    %601 = vmatpush.msra.mxu0 0.0
    %602 = vmatpush.msra.mxu0 0.0
    %603 = vmatpush.msra.mxu0 0.0
    %604 = vmatpush.msra.mxu0 0.0
    %605 = vmatpush.msra.mxu0 0.0
    %606 = vmatpush.msra.mxu0 0.0
    %607 = vmatpush.msra.mxu0 0.0
    %608 = vmatpush.msra.mxu0 0.0
    %609 = vmatpush.msra.mxu0 0.0
    %610 = vmatpush.msra.mxu0 0.0
    %611 = vmatpush.msra.mxu0 0.0
    %612 = vmatpush.msra.mxu0 0.0
    %613 = vmatpush.msra.mxu0 %v64
    %614 = vmatpush.msra.mxu0 %v63
    %615 = vmatpush.msra.mxu0 %v62
    %616 = vmatpush.msra.mxu0 %v61
    %617 = vmatmul.f32.gmra.mxu0 %v536
    %v618 = vpop.f32.mrf.mxu0
    %v619 = vadd.f32 0.0, %v618
    %620 = vdwg.mxu0
    %v621 = vadd.f32 %v534, %v619
    %v622 = vxor.u32 %v558, 2147483648
    %v623 = vmul.f32 %v622, 1.442695
    %v624 = vpow.pop %v623
    %v625 = vadd.f32 %v624, 1.0
    %v626 = vrcp.pop %v625
    %v627 = vmul.f32 %v625, %v626
    %v628 = vsub.f32 1.0, %v627
    %v629 = vmul.f32 %v626, %v628
    %v630 = vadd.f32 %v626, %v629
    %vm631 = vweird.f32 %v625
    %vm632 = vweird.f32 %v626
    %vm633 = vmor %vm631, %vm632
    %v634 = vsel %vm633, %v626, %v630
    %v635 = vand.u32 2147483647, %v625
    %vm636 = vcmp.eq.f32.partialorder %v635, 8.507059e+37
    %v637 = vand.u32 %v625, 2147483648
    %v638 = vor.u32 1.1754944e-38, %v637
    %v639 = vsel %vm636, %v638, %v634
    %v640 = vmul.f32 1.0, %v639
    %v641 = vxor.u32 %v579, 2147483648
    %v642 = vmul.f32 %v641, 1.442695
    %v643 = vpow.pop %v642
    %v644 = vadd.f32 %v643, 1.0
    %v645 = vrcp.pop %v644
    %v646 = vmul.f32 %v644, %v645
    %v647 = vsub.f32 1.0, %v646
    %v648 = vmul.f32 %v645, %v647
    %v649 = vadd.f32 %v645, %v648
    %vm650 = vweird.f32 %v644
    %vm651 = vweird.f32 %v645
    %vm652 = vmor %vm650, %vm651
    %v653 = vsel %vm652, %v645, %v649
    %v654 = vand.u32 2147483647, %v644
    %vm655 = vcmp.eq.f32.partialorder %v654, 8.507059e+37
    %v656 = vand.u32 %v644, 2147483648
    %v657 = vor.u32 1.1754944e-38, %v656
    %v658 = vsel %vm655, %v657, %v653
    %v659 = vmul.f32 1.0, %v658
    %v660 = vtanh.pop %v600
    %v661 = vxor.u32 %v621, 2147483648
    %v662 = vmul.f32 %v661, 1.442695
    %v663 = vpow.pop %v662
    %v664 = vadd.f32 %v663, 1.0
    %v665 = vrcp.pop %v664
    %v666 = vmul.f32 %v664, %v665
    %v667 = vsub.f32 1.0, %v666
    %v668 = vmul.f32 %v665, %v667
    %v669 = vadd.f32 %v665, %v668
    %vm670 = vweird.f32 %v664
    %vm671 = vweird.f32 %v665
    %vm672 = vmor %vm670, %vm671
    %v673 = vsel %vm672, %v665, %v669
    %v674 = vand.u32 2147483647, %v664
    %vm675 = vcmp.eq.f32.partialorder %v674, 8.507059e+37
    %v676 = vand.u32 %v664, 2147483648
    %v677 = vor.u32 1.1754944e-38, %v676
    %v678 = vsel %vm675, %v677, %v673
    %v679 = vmul.f32 1.0, %v678
    %v680 = vmul.f32 %v659, %v527
    %v681 = vmul.f32 %v640, %v660
    %v682 = vadd.f32 %v680, %v681
    %v683 = vtanh.pop %v682
    %v684 = vmul.f32 %v679, %v683
    %s685 = scalar_lea.vmem [#allocation2], 128
    %v686 = vld [vmem:[%s685] sm:$0xff]
    %v687 = vld [vmem:[%s685 + $0x8] sm:$0xff]
    %v688 = vld [vmem:[%s685 + $0x10] sm:$0xff]
    %v689 = vld [vmem:[%s685 + $0x18] sm:$0xff]
    %v691 = vsel %vm69, %v684, 0
    %693 = vmatpush.msra.mxu0 0.0
    %694 = vmatpush.msra.mxu0 0.0
    %695 = vmatpush.msra.mxu0 0.0
    %696 = vmatpush.msra.mxu0 0.0
    %697 = vmatpush.msra.mxu0 0.0
    %698 = vmatpush.msra.mxu0 0.0
    %699 = vmatpush.msra.mxu0 0.0
    %700 = vmatpush.msra.mxu0 0.0
    %701 = vmatpush.msra.mxu0 0.0
    %702 = vmatpush.msra.mxu0 0.0
    %703 = vmatpush.msra.mxu0 0.0
    %704 = vmatpush.msra.mxu0 0.0
    %705 = vmatpush.msra.mxu0 %v52
    %706 = vmatpush.msra.mxu0 %v51
    %707 = vmatpush.msra.mxu0 %v50
    %708 = vmatpush.msra.mxu0 %v49
    %709 = vmatmul.f32.gmra.mxu0 %v691
    %v710 = vpop.f32.mrf.mxu0
    %v711 = vadd.f32 0.0, %v710
    %712 = vdwg.mxu0
    %v713 = vadd.f32 %v686, %v711
    %714 = vmatpush.msra.mxu0 0.0
    %715 = vmatpush.msra.mxu0 0.0
    %716 = vmatpush.msra.mxu0 0.0
    %717 = vmatpush.msra.mxu0 0.0
    %718 = vmatpush.msra.mxu0 0.0
    %719 = vmatpush.msra.mxu0 0.0
    %720 = vmatpush.msra.mxu0 0.0
    %721 = vmatpush.msra.mxu0 0.0
    %722 = vmatpush.msra.mxu0 0.0
    %723 = vmatpush.msra.mxu0 0.0
    %724 = vmatpush.msra.mxu0 0.0
    %725 = vmatpush.msra.mxu0 0.0
    %726 = vmatpush.msra.mxu0 %v56
    %727 = vmatpush.msra.mxu0 %v55
    %728 = vmatpush.msra.mxu0 %v54
    %729 = vmatpush.msra.mxu0 %v53
    %730 = vmatmul.f32.gmra.mxu0 %v691
    %v731 = vpop.f32.mrf.mxu0
    %v732 = vadd.f32 0.0, %v731
    %733 = vdwg.mxu0
    %v734 = vadd.f32 %v687, %v732
    %735 = vmatpush.msra.mxu0 0.0
    %736 = vmatpush.msra.mxu0 0.0
    %737 = vmatpush.msra.mxu0 0.0
    %738 = vmatpush.msra.mxu0 0.0
    %739 = vmatpush.msra.mxu0 0.0
    %740 = vmatpush.msra.mxu0 0.0
    %741 = vmatpush.msra.mxu0 0.0
    %742 = vmatpush.msra.mxu0 0.0
    %743 = vmatpush.msra.mxu0 0.0
    %744 = vmatpush.msra.mxu0 0.0
    %745 = vmatpush.msra.mxu0 0.0
    %746 = vmatpush.msra.mxu0 0.0
    %747 = vmatpush.msra.mxu0 %v60
    %748 = vmatpush.msra.mxu0 %v59
    %749 = vmatpush.msra.mxu0 %v58
    %750 = vmatpush.msra.mxu0 %v57
    %751 = vmatmul.f32.gmra.mxu0 %v691
    %v752 = vpop.f32.mrf.mxu0
    %v753 = vadd.f32 0.0, %v752
    %754 = vdwg.mxu0
    %v755 = vadd.f32 %v688, %v753
    %756 = vmatpush.msra.mxu0 0.0
    %757 = vmatpush.msra.mxu0 0.0
    %758 = vmatpush.msra.mxu0 0.0
    %759 = vmatpush.msra.mxu0 0.0
    %760 = vmatpush.msra.mxu0 0.0
    %761 = vmatpush.msra.mxu0 0.0
    %762 = vmatpush.msra.mxu0 0.0
    %763 = vmatpush.msra.mxu0 0.0
    %764 = vmatpush.msra.mxu0 0.0
    %765 = vmatpush.msra.mxu0 0.0
    %766 = vmatpush.msra.mxu0 0.0
    %767 = vmatpush.msra.mxu0 0.0
    %768 = vmatpush.msra.mxu0 %v64
    %769 = vmatpush.msra.mxu0 %v63
    %770 = vmatpush.msra.mxu0 %v62
    %771 = vmatpush.msra.mxu0 %v61
    %772 = vmatmul.f32.gmra.mxu0 %v691
    %v773 = vpop.f32.mrf.mxu0
    %v774 = vadd.f32 0.0, %v773
    %775 = vdwg.mxu0
    %v776 = vadd.f32 %v689, %v774
    %v777 = vxor.u32 %v713, 2147483648
    %v778 = vmul.f32 %v777, 1.442695
    %v779 = vpow.pop %v778
    %v780 = vadd.f32 %v779, 1.0
    %v781 = vrcp.pop %v780
    %v782 = vmul.f32 %v780, %v781
    %v783 = vsub.f32 1.0, %v782
    %v784 = vmul.f32 %v781, %v783
    %v785 = vadd.f32 %v781, %v784
    %vm786 = vweird.f32 %v780
    %vm787 = vweird.f32 %v781
    %vm788 = vmor %vm786, %vm787
    %v789 = vsel %vm788, %v781, %v785
    %v790 = vand.u32 2147483647, %v780
    %vm791 = vcmp.eq.f32.partialorder %v790, 8.507059e+37
    %v792 = vand.u32 %v780, 2147483648
    %v793 = vor.u32 1.1754944e-38, %v792
    %v794 = vsel %vm791, %v793, %v789
    %v795 = vmul.f32 1.0, %v794
    %v796 = vxor.u32 %v734, 2147483648
    %v797 = vmul.f32 %v796, 1.442695
    %v798 = vpow.pop %v797
    %v799 = vadd.f32 %v798, 1.0
    %v800 = vrcp.pop %v799
    %v801 = vmul.f32 %v799, %v800
    %v802 = vsub.f32 1.0, %v801
    %v803 = vmul.f32 %v800, %v802
    %v804 = vadd.f32 %v800, %v803
    %vm805 = vweird.f32 %v799
    %vm806 = vweird.f32 %v800
    %vm807 = vmor %vm805, %vm806
    %v808 = vsel %vm807, %v800, %v804
    %v809 = vand.u32 2147483647, %v799
    %vm810 = vcmp.eq.f32.partialorder %v809, 8.507059e+37
    %v811 = vand.u32 %v799, 2147483648
    %v812 = vor.u32 1.1754944e-38, %v811
    %v813 = vsel %vm810, %v812, %v808
    %v814 = vmul.f32 1.0, %v813
    %v815 = vtanh.pop %v755
    %v816 = vxor.u32 %v776, 2147483648
    %v817 = vmul.f32 %v816, 1.442695
    %v818 = vpow.pop %v817
    %v819 = vadd.f32 %v818, 1.0
    %v820 = vrcp.pop %v819
    %v821 = vmul.f32 %v819, %v820
    %v822 = vsub.f32 1.0, %v821
    %v823 = vmul.f32 %v820, %v822
    %v824 = vadd.f32 %v820, %v823
    %vm825 = vweird.f32 %v819
    %vm826 = vweird.f32 %v820
    %vm827 = vmor %vm825, %vm826
    %v828 = vsel %vm827, %v820, %v824
    %v829 = vand.u32 2147483647, %v819
    %vm830 = vcmp.eq.f32.partialorder %v829, 8.507059e+37
    %v831 = vand.u32 %v819, 2147483648
    %v832 = vor.u32 1.1754944e-38, %v831
    %v833 = vsel %vm830, %v832, %v828
    %v834 = vmul.f32 1.0, %v833
    %v835 = vmul.f32 %v814, %v682
    %v836 = vmul.f32 %v795, %v815
    %v837 = vadd.f32 %v835, %v836
    %v838 = vtanh.pop %v837
    %v839 = vmul.f32 %v834, %v838
    %s840 = scalar_lea.vmem [#allocation2], 160
    %v841 = vld [vmem:[%s840] sm:$0xff]
    %v842 = vld [vmem:[%s840 + $0x8] sm:$0xff]
    %v843 = vld [vmem:[%s840 + $0x10] sm:$0xff]
    %v844 = vld [vmem:[%s840 + $0x18] sm:$0xff]
    %v846 = vsel %vm69, %v839, 0
    %848 = vmatpush.msra.mxu0 0.0
    %849 = vmatpush.msra.mxu0 0.0
    %850 = vmatpush.msra.mxu0 0.0
    %851 = vmatpush.msra.mxu0 0.0
    %852 = vmatpush.msra.mxu0 0.0
    %853 = vmatpush.msra.mxu0 0.0
    %854 = vmatpush.msra.mxu0 0.0
    %855 = vmatpush.msra.mxu0 0.0
    %856 = vmatpush.msra.mxu0 0.0
    %857 = vmatpush.msra.mxu0 0.0
    %858 = vmatpush.msra.mxu0 0.0
    %859 = vmatpush.msra.mxu0 0.0
    %860 = vmatpush.msra.mxu0 %v52
    %861 = vmatpush.msra.mxu0 %v51
    %862 = vmatpush.msra.mxu0 %v50
    %863 = vmatpush.msra.mxu0 %v49
    %864 = vmatmul.f32.gmra.mxu0 %v846
    %v865 = vpop.f32.mrf.mxu0
    %v866 = vadd.f32 0.0, %v865
    %867 = vdwg.mxu0
    %v868 = vadd.f32 %v841, %v866
    %869 = vmatpush.msra.mxu0 0.0
    %870 = vmatpush.msra.mxu0 0.0
    %871 = vmatpush.msra.mxu0 0.0
    %872 = vmatpush.msra.mxu0 0.0
    %873 = vmatpush.msra.mxu0 0.0
    %874 = vmatpush.msra.mxu0 0.0
    %875 = vmatpush.msra.mxu0 0.0
    %876 = vmatpush.msra.mxu0 0.0
    %877 = vmatpush.msra.mxu0 0.0
    %878 = vmatpush.msra.mxu0 0.0
    %879 = vmatpush.msra.mxu0 0.0
    %880 = vmatpush.msra.mxu0 0.0
    %881 = vmatpush.msra.mxu0 %v56
    %882 = vmatpush.msra.mxu0 %v55
    %883 = vmatpush.msra.mxu0 %v54
    %884 = vmatpush.msra.mxu0 %v53
    %885 = vmatmul.f32.gmra.mxu0 %v846
    %v886 = vpop.f32.mrf.mxu0
    %v887 = vadd.f32 0.0, %v886
    %888 = vdwg.mxu0
    %v889 = vadd.f32 %v842, %v887
    %890 = vmatpush.msra.mxu0 0.0
    %891 = vmatpush.msra.mxu0 0.0
    %892 = vmatpush.msra.mxu0 0.0
    %893 = vmatpush.msra.mxu0 0.0
    %894 = vmatpush.msra.mxu0 0.0
    %895 = vmatpush.msra.mxu0 0.0
    %896 = vmatpush.msra.mxu0 0.0
    %897 = vmatpush.msra.mxu0 0.0
    %898 = vmatpush.msra.mxu0 0.0
    %899 = vmatpush.msra.mxu0 0.0
    %900 = vmatpush.msra.mxu0 0.0
    %901 = vmatpush.msra.mxu0 0.0
    %902 = vmatpush.msra.mxu0 %v60
    %903 = vmatpush.msra.mxu0 %v59
    %904 = vmatpush.msra.mxu0 %v58
    %905 = vmatpush.msra.mxu0 %v57
    %906 = vmatmul.f32.gmra.mxu0 %v846
    %v907 = vpop.f32.mrf.mxu0
    %v908 = vadd.f32 0.0, %v907
    %909 = vdwg.mxu0
    %v910 = vadd.f32 %v843, %v908
    %911 = vmatpush.msra.mxu0 0.0
    %912 = vmatpush.msra.mxu0 0.0
    %913 = vmatpush.msra.mxu0 0.0
    %914 = vmatpush.msra.mxu0 0.0
    %915 = vmatpush.msra.mxu0 0.0
    %916 = vmatpush.msra.mxu0 0.0
    %917 = vmatpush.msra.mxu0 0.0
    %918 = vmatpush.msra.mxu0 0.0
    %919 = vmatpush.msra.mxu0 0.0
    %920 = vmatpush.msra.mxu0 0.0
    %921 = vmatpush.msra.mxu0 0.0
    %922 = vmatpush.msra.mxu0 0.0
    %923 = vmatpush.msra.mxu0 %v64
    %924 = vmatpush.msra.mxu0 %v63
    %925 = vmatpush.msra.mxu0 %v62
    %926 = vmatpush.msra.mxu0 %v61
    %927 = vmatmul.f32.gmra.mxu0 %v846
    %v928 = vpop.f32.mrf.mxu0
    %v929 = vadd.f32 0.0, %v928
    %930 = vdwg.mxu0
    %v931 = vadd.f32 %v844, %v929
    %v932 = vxor.u32 %v868, 2147483648
    %v933 = vmul.f32 %v932, 1.442695
    %v934 = vpow.pop %v933
    %v935 = vadd.f32 %v934, 1.0
    %v936 = vrcp.pop %v935
    %v937 = vmul.f32 %v935, %v936
    %v938 = vsub.f32 1.0, %v937
    %v939 = vmul.f32 %v936, %v938
    %v940 = vadd.f32 %v936, %v939
    %vm941 = vweird.f32 %v935
    %vm942 = vweird.f32 %v936
    %vm943 = vmor %vm941, %vm942
    %v944 = vsel %vm943, %v936, %v940
    %v945 = vand.u32 2147483647, %v935
    %vm946 = vcmp.eq.f32.partialorder %v945, 8.507059e+37
    %v947 = vand.u32 %v935, 2147483648
    %v948 = vor.u32 1.1754944e-38, %v947
    %v949 = vsel %vm946, %v948, %v944
    %v950 = vmul.f32 1.0, %v949
    %v951 = vxor.u32 %v889, 2147483648
    %v952 = vmul.f32 %v951, 1.442695
    %v953 = vpow.pop %v952
    %v954 = vadd.f32 %v953, 1.0
    %v955 = vrcp.pop %v954
    %v956 = vmul.f32 %v954, %v955
    %v957 = vsub.f32 1.0, %v956
    %v958 = vmul.f32 %v955, %v957
    %v959 = vadd.f32 %v955, %v958
    %vm960 = vweird.f32 %v954
    %vm961 = vweird.f32 %v955
    %vm962 = vmor %vm960, %vm961
    %v963 = vsel %vm962, %v955, %v959
    %v964 = vand.u32 2147483647, %v954
    %vm965 = vcmp.eq.f32.partialorder %v964, 8.507059e+37
    %v966 = vand.u32 %v954, 2147483648
    %v967 = vor.u32 1.1754944e-38, %v966
    %v968 = vsel %vm965, %v967, %v963
    %v969 = vmul.f32 1.0, %v968
    %v970 = vtanh.pop %v910
    %v971 = vxor.u32 %v931, 2147483648
    %v972 = vmul.f32 %v971, 1.442695
    %v973 = vpow.pop %v972
    %v974 = vadd.f32 %v973, 1.0
    %v975 = vrcp.pop %v974
    %v976 = vmul.f32 %v974, %v975
    %v977 = vsub.f32 1.0, %v976
    %v978 = vmul.f32 %v975, %v977
    %v979 = vadd.f32 %v975, %v978
    %vm980 = vweird.f32 %v974
    %vm981 = vweird.f32 %v975
    %vm982 = vmor %vm980, %vm981
    %v983 = vsel %vm982, %v975, %v979
    %v984 = vand.u32 2147483647, %v974
    %vm985 = vcmp.eq.f32.partialorder %v984, 8.507059e+37
    %v986 = vand.u32 %v974, 2147483648
    %v987 = vor.u32 1.1754944e-38, %v986
    %v988 = vsel %vm985, %v987, %v983
    %v989 = vmul.f32 1.0, %v988
    %v990 = vmul.f32 %v969, %v837
    %v991 = vmul.f32 %v950, %v970
    %v992 = vadd.f32 %v990, %v991
    %v993 = vtanh.pop %v992
    %v994 = vmul.f32 %v989, %v993
    %s995 = scalar_lea.vmem [#allocation2], 192
    %v996 = vld [vmem:[%s995] sm:$0xff]
    %v997 = vld [vmem:[%s995 + $0x8] sm:$0xff]
    %v998 = vld [vmem:[%s995 + $0x10] sm:$0xff]
    %v999 = vld [vmem:[%s995 + $0x18] sm:$0xff]
    %v1001 = vsel %vm69, %v994, 0
    %1003 = vmatpush.msra.mxu0 0.0
    %1004 = vmatpush.msra.mxu0 0.0
    %1005 = vmatpush.msra.mxu0 0.0
    %1006 = vmatpush.msra.mxu0 0.0
    %1007 = vmatpush.msra.mxu0 0.0
    %1008 = vmatpush.msra.mxu0 0.0
    %1009 = vmatpush.msra.mxu0 0.0
    %1010 = vmatpush.msra.mxu0 0.0
    %1011 = vmatpush.msra.mxu0 0.0
    %1012 = vmatpush.msra.mxu0 0.0
    %1013 = vmatpush.msra.mxu0 0.0
    %1014 = vmatpush.msra.mxu0 0.0
    %1015 = vmatpush.msra.mxu0 %v52
    %1016 = vmatpush.msra.mxu0 %v51
    %1017 = vmatpush.msra.mxu0 %v50
    %1018 = vmatpush.msra.mxu0 %v49
    %1019 = vmatmul.f32.gmra.mxu0 %v1001
    %v1020 = vpop.f32.mrf.mxu0
    %v1021 = vadd.f32 0.0, %v1020
    %1022 = vdwg.mxu0
    %v1023 = vadd.f32 %v996, %v1021
    %1024 = vmatpush.msra.mxu0 0.0
    %1025 = vmatpush.msra.mxu0 0.0
    %1026 = vmatpush.msra.mxu0 0.0
    %1027 = vmatpush.msra.mxu0 0.0
    %1028 = vmatpush.msra.mxu0 0.0
    %1029 = vmatpush.msra.mxu0 0.0
    %1030 = vmatpush.msra.mxu0 0.0
    %1031 = vmatpush.msra.mxu0 0.0
    %1032 = vmatpush.msra.mxu0 0.0
    %1033 = vmatpush.msra.mxu0 0.0
    %1034 = vmatpush.msra.mxu0 0.0
    %1035 = vmatpush.msra.mxu0 0.0
    %1036 = vmatpush.msra.mxu0 %v56
    %1037 = vmatpush.msra.mxu0 %v55
    %1038 = vmatpush.msra.mxu0 %v54
    %1039 = vmatpush.msra.mxu0 %v53
    %1040 = vmatmul.f32.gmra.mxu0 %v1001
    %v1041 = vpop.f32.mrf.mxu0
    %v1042 = vadd.f32 0.0, %v1041
    %1043 = vdwg.mxu0
    %v1044 = vadd.f32 %v997, %v1042
    %1045 = vmatpush.msra.mxu0 0.0
    %1046 = vmatpush.msra.mxu0 0.0
    %1047 = vmatpush.msra.mxu0 0.0
    %1048 = vmatpush.msra.mxu0 0.0
    %1049 = vmatpush.msra.mxu0 0.0
    %1050 = vmatpush.msra.mxu0 0.0
    %1051 = vmatpush.msra.mxu0 0.0
    %1052 = vmatpush.msra.mxu0 0.0
    %1053 = vmatpush.msra.mxu0 0.0
    %1054 = vmatpush.msra.mxu0 0.0
    %1055 = vmatpush.msra.mxu0 0.0
    %1056 = vmatpush.msra.mxu0 0.0
    %1057 = vmatpush.msra.mxu0 %v60
    %1058 = vmatpush.msra.mxu0 %v59
    %1059 = vmatpush.msra.mxu0 %v58
    %1060 = vmatpush.msra.mxu0 %v57
    %1061 = vmatmul.f32.gmra.mxu0 %v1001
    %v1062 = vpop.f32.mrf.mxu0
    %v1063 = vadd.f32 0.0, %v1062
    %1064 = vdwg.mxu0
    %v1065 = vadd.f32 %v998, %v1063
    %1066 = vmatpush.msra.mxu0 0.0
    %1067 = vmatpush.msra.mxu0 0.0
    %1068 = vmatpush.msra.mxu0 0.0
    %1069 = vmatpush.msra.mxu0 0.0
    %1070 = vmatpush.msra.mxu0 0.0
    %1071 = vmatpush.msra.mxu0 0.0
    %1072 = vmatpush.msra.mxu0 0.0
    %1073 = vmatpush.msra.mxu0 0.0
    %1074 = vmatpush.msra.mxu0 0.0
    %1075 = vmatpush.msra.mxu0 0.0
    %1076 = vmatpush.msra.mxu0 0.0
    %1077 = vmatpush.msra.mxu0 0.0
    %1078 = vmatpush.msra.mxu0 %v64
    %1079 = vmatpush.msra.mxu0 %v63
    %1080 = vmatpush.msra.mxu0 %v62
    %1081 = vmatpush.msra.mxu0 %v61
    %1082 = vmatmul.f32.gmra.mxu0 %v1001
    %v1083 = vpop.f32.mrf.mxu0
    %v1084 = vadd.f32 0.0, %v1083
    %1085 = vdwg.mxu0
    %v1086 = vadd.f32 %v999, %v1084
    %v1087 = vxor.u32 %v1023, 2147483648
    %v1088 = vmul.f32 %v1087, 1.442695
    %v1089 = vpow.pop %v1088
    %v1090 = vadd.f32 %v1089, 1.0
    %v1091 = vrcp.pop %v1090
    %v1092 = vmul.f32 %v1090, %v1091
    %v1093 = vsub.f32 1.0, %v1092
    %v1094 = vmul.f32 %v1091, %v1093
    %v1095 = vadd.f32 %v1091, %v1094
    %vm1096 = vweird.f32 %v1090
    %vm1097 = vweird.f32 %v1091
    %vm1098 = vmor %vm1096, %vm1097
    %v1099 = vsel %vm1098, %v1091, %v1095
    %v1100 = vand.u32 2147483647, %v1090
    %vm1101 = vcmp.eq.f32.partialorder %v1100, 8.507059e+37
    %v1102 = vand.u32 %v1090, 2147483648
    %v1103 = vor.u32 1.1754944e-38, %v1102
    %v1104 = vsel %vm1101, %v1103, %v1099
    %v1105 = vmul.f32 1.0, %v1104
    %v1106 = vxor.u32 %v1044, 2147483648
    %v1107 = vmul.f32 %v1106, 1.442695
    %v1108 = vpow.pop %v1107
    %v1109 = vadd.f32 %v1108, 1.0
    %v1110 = vrcp.pop %v1109
    %v1111 = vmul.f32 %v1109, %v1110
    %v1112 = vsub.f32 1.0, %v1111
    %v1113 = vmul.f32 %v1110, %v1112
    %v1114 = vadd.f32 %v1110, %v1113
    %vm1115 = vweird.f32 %v1109
    %vm1116 = vweird.f32 %v1110
    %vm1117 = vmor %vm1115, %vm1116
    %v1118 = vsel %vm1117, %v1110, %v1114
    %v1119 = vand.u32 2147483647, %v1109
    %vm1120 = vcmp.eq.f32.partialorder %v1119, 8.507059e+37
    %v1121 = vand.u32 %v1109, 2147483648
    %v1122 = vor.u32 1.1754944e-38, %v1121
    %v1123 = vsel %vm1120, %v1122, %v1118
    %v1124 = vmul.f32 1.0, %v1123
    %v1125 = vtanh.pop %v1065
    %v1126 = vxor.u32 %v1086, 2147483648
    %v1127 = vmul.f32 %v1126, 1.442695
    %v1128 = vpow.pop %v1127
    %v1129 = vadd.f32 %v1128, 1.0
    %v1130 = vrcp.pop %v1129
    %v1131 = vmul.f32 %v1129, %v1130
    %v1132 = vsub.f32 1.0, %v1131
    %v1133 = vmul.f32 %v1130, %v1132
    %v1134 = vadd.f32 %v1130, %v1133
    %vm1135 = vweird.f32 %v1129
    %vm1136 = vweird.f32 %v1130
    %vm1137 = vmor %vm1135, %vm1136
    %v1138 = vsel %vm1137, %v1130, %v1134
    %v1139 = vand.u32 2147483647, %v1129
    %vm1140 = vcmp.eq.f32.partialorder %v1139, 8.507059e+37
    %v1141 = vand.u32 %v1129, 2147483648
    %v1142 = vor.u32 1.1754944e-38, %v1141
    %v1143 = vsel %vm1140, %v1142, %v1138
    %v1144 = vmul.f32 1.0, %v1143
    %v1145 = vmul.f32 %v1124, %v992
    %v1146 = vmul.f32 %v1105, %v1125
    %v1147 = vadd.f32 %v1145, %v1146
    %v1148 = vtanh.pop %v1147
    %v1149 = vmul.f32 %v1144, %v1148
    %s1150 = scalar_lea.vmem [#allocation2], 224
    %v1151 = vld [vmem:[%s1150] sm:$0xff]
    %v1152 = vld [vmem:[%s1150 + $0x8] sm:$0xff]
    %v1153 = vld [vmem:[%s1150 + $0x10] sm:$0xff]
    %v1154 = vld [vmem:[%s1150 + $0x18] sm:$0xff]
    %v1156 = vsel %vm69, %v1149, 0
    %1158 = vmatpush.msra.mxu0 0.0
    %1159 = vmatpush.msra.mxu0 0.0
    %1160 = vmatpush.msra.mxu0 0.0
    %1161 = vmatpush.msra.mxu0 0.0
    %1162 = vmatpush.msra.mxu0 0.0
    %1163 = vmatpush.msra.mxu0 0.0
    %1164 = vmatpush.msra.mxu0 0.0
    %1165 = vmatpush.msra.mxu0 0.0
    %1166 = vmatpush.msra.mxu0 0.0
    %1167 = vmatpush.msra.mxu0 0.0
    %1168 = vmatpush.msra.mxu0 0.0
    %1169 = vmatpush.msra.mxu0 0.0
    %1170 = vmatpush.msra.mxu0 %v52
    %1171 = vmatpush.msra.mxu0 %v51
    %1172 = vmatpush.msra.mxu0 %v50
    %1173 = vmatpush.msra.mxu0 %v49
    %1174 = vmatmul.f32.gmra.mxu0 %v1156
    %v1175 = vpop.f32.mrf.mxu0
    %v1176 = vadd.f32 0.0, %v1175
    %1177 = vdwg.mxu0
    %v1178 = vadd.f32 %v1151, %v1176
    %1179 = vmatpush.msra.mxu0 0.0
    %1180 = vmatpush.msra.mxu0 0.0
    %1181 = vmatpush.msra.mxu0 0.0
    %1182 = vmatpush.msra.mxu0 0.0
    %1183 = vmatpush.msra.mxu0 0.0
    %1184 = vmatpush.msra.mxu0 0.0
    %1185 = vmatpush.msra.mxu0 0.0
    %1186 = vmatpush.msra.mxu0 0.0
    %1187 = vmatpush.msra.mxu0 0.0
    %1188 = vmatpush.msra.mxu0 0.0
    %1189 = vmatpush.msra.mxu0 0.0
    %1190 = vmatpush.msra.mxu0 0.0
    %1191 = vmatpush.msra.mxu0 %v56
    %1192 = vmatpush.msra.mxu0 %v55
    %1193 = vmatpush.msra.mxu0 %v54
    %1194 = vmatpush.msra.mxu0 %v53
    %1195 = vmatmul.f32.gmra.mxu0 %v1156
    %v1196 = vpop.f32.mrf.mxu0
    %v1197 = vadd.f32 0.0, %v1196
    %1198 = vdwg.mxu0
    %v1199 = vadd.f32 %v1152, %v1197
    %1200 = vmatpush.msra.mxu0 0.0
    %1201 = vmatpush.msra.mxu0 0.0
    %1202 = vmatpush.msra.mxu0 0.0
    %1203 = vmatpush.msra.mxu0 0.0
    %1204 = vmatpush.msra.mxu0 0.0
    %1205 = vmatpush.msra.mxu0 0.0
    %1206 = vmatpush.msra.mxu0 0.0
    %1207 = vmatpush.msra.mxu0 0.0
    %1208 = vmatpush.msra.mxu0 0.0
    %1209 = vmatpush.msra.mxu0 0.0
    %1210 = vmatpush.msra.mxu0 0.0
    %1211 = vmatpush.msra.mxu0 0.0
    %1212 = vmatpush.msra.mxu0 %v60
    %1213 = vmatpush.msra.mxu0 %v59
    %1214 = vmatpush.msra.mxu0 %v58
    %1215 = vmatpush.msra.mxu0 %v57
    %1216 = vmatmul.f32.gmra.mxu0 %v1156
    %v1217 = vpop.f32.mrf.mxu0
    %v1218 = vadd.f32 0.0, %v1217
    %1219 = vdwg.mxu0
    %v1220 = vadd.f32 %v1153, %v1218
    %1221 = vmatpush.msra.mxu0 0.0
    %1222 = vmatpush.msra.mxu0 0.0
    %1223 = vmatpush.msra.mxu0 0.0
    %1224 = vmatpush.msra.mxu0 0.0
    %1225 = vmatpush.msra.mxu0 0.0
    %1226 = vmatpush.msra.mxu0 0.0
    %1227 = vmatpush.msra.mxu0 0.0
    %1228 = vmatpush.msra.mxu0 0.0
    %1229 = vmatpush.msra.mxu0 0.0
    %1230 = vmatpush.msra.mxu0 0.0
    %1231 = vmatpush.msra.mxu0 0.0
    %1232 = vmatpush.msra.mxu0 0.0
    %1233 = vmatpush.msra.mxu0 %v64
    %1234 = vmatpush.msra.mxu0 %v63
    %1235 = vmatpush.msra.mxu0 %v62
    %1236 = vmatpush.msra.mxu0 %v61
    %1237 = vmatmul.f32.gmra.mxu0 %v1156
    %v1238 = vpop.f32.mrf.mxu0
    %v1239 = vadd.f32 0.0, %v1238
    %1240 = vdwg.mxu0
    %v1241 = vadd.f32 %v1154, %v1239
    %v1242 = vxor.u32 %v1178, 2147483648
    %v1243 = vmul.f32 %v1242, 1.442695
    %v1244 = vpow.pop %v1243
    %v1245 = vadd.f32 %v1244, 1.0
    %v1246 = vrcp.pop %v1245
    %v1247 = vmul.f32 %v1245, %v1246
    %v1248 = vsub.f32 1.0, %v1247
    %v1249 = vmul.f32 %v1246, %v1248
    %v1250 = vadd.f32 %v1246, %v1249
    %vm1251 = vweird.f32 %v1245
    %vm1252 = vweird.f32 %v1246
    %vm1253 = vmor %vm1251, %vm1252
    %v1254 = vsel %vm1253, %v1246, %v1250
    %v1255 = vand.u32 2147483647, %v1245
    %vm1256 = vcmp.eq.f32.partialorder %v1255, 8.507059e+37
    %v1257 = vand.u32 %v1245, 2147483648
    %v1258 = vor.u32 1.1754944e-38, %v1257
    %v1259 = vsel %vm1256, %v1258, %v1254
    %v1260 = vmul.f32 1.0, %v1259
    %v1261 = vxor.u32 %v1199, 2147483648
    %v1262 = vmul.f32 %v1261, 1.442695
    %v1263 = vpow.pop %v1262
    %v1264 = vadd.f32 %v1263, 1.0
    %v1265 = vrcp.pop %v1264
    %v1266 = vmul.f32 %v1264, %v1265
    %v1267 = vsub.f32 1.0, %v1266
    %v1268 = vmul.f32 %v1265, %v1267
    %v1269 = vadd.f32 %v1265, %v1268
    %vm1270 = vweird.f32 %v1264
    %vm1271 = vweird.f32 %v1265
    %vm1272 = vmor %vm1270, %vm1271
    %v1273 = vsel %vm1272, %v1265, %v1269
    %v1274 = vand.u32 2147483647, %v1264
    %vm1275 = vcmp.eq.f32.partialorder %v1274, 8.507059e+37
    %v1276 = vand.u32 %v1264, 2147483648
    %v1277 = vor.u32 1.1754944e-38, %v1276
    %v1278 = vsel %vm1275, %v1277, %v1273
    %v1279 = vmul.f32 1.0, %v1278
    %v1280 = vtanh.pop %v1220
    %v1281 = vxor.u32 %v1241, 2147483648
    %v1282 = vmul.f32 %v1281, 1.442695
    %v1283 = vpow.pop %v1282
    %v1284 = vadd.f32 %v1283, 1.0
    %v1285 = vrcp.pop %v1284
    %v1286 = vmul.f32 %v1284, %v1285
    %v1287 = vsub.f32 1.0, %v1286
    %v1288 = vmul.f32 %v1285, %v1287
    %v1289 = vadd.f32 %v1285, %v1288
    %vm1290 = vweird.f32 %v1284
    %vm1291 = vweird.f32 %v1285
    %vm1292 = vmor %vm1290, %vm1291
    %v1293 = vsel %vm1292, %v1285, %v1289
    %v1294 = vand.u32 2147483647, %v1284
    %vm1295 = vcmp.eq.f32.partialorder %v1294, 8.507059e+37
    %v1296 = vand.u32 %v1284, 2147483648
    %v1297 = vor.u32 1.1754944e-38, %v1296
    %v1298 = vsel %vm1295, %v1297, %v1293
    %v1299 = vmul.f32 1.0, %v1298
    %v1300 = vmul.f32 %v1279, %v1147
    %v1301 = vmul.f32 %v1260, %v1280
    %v1302 = vadd.f32 %v1300, %v1301
    %v1303 = vtanh.pop %v1302
    %v1304 = vmul.f32 %v1299, %v1303
    %v1305 = vld [vmem:[%s2] sm:$0xff]
    %v1306 = vld [vmem:[%s2 + $0x8] sm:$0xff]
    %v1307 = vld [vmem:[%s2 + $0x10] sm:$0xff]
    %v1308 = vld [vmem:[%s2 + $0x18] sm:$0xff]
    %v1309 = vld [vmem:[%s3] sm:$0x1]
    %v1311 = vperm.slane %v1309, 0
    %v1314 = vsel %vm69, %v1304, 0
    %1316 = vmatpush.msra.mxu0 0.0
    %1317 = vmatpush.msra.mxu0 0.0
    %1318 = vmatpush.msra.mxu0 0.0
    %1319 = vmatpush.msra.mxu0 0.0
    %1320 = vmatpush.msra.mxu0 0.0
    %1321 = vmatpush.msra.mxu0 0.0
    %1322 = vmatpush.msra.mxu0 0.0
    %1323 = vmatpush.msra.mxu0 0.0
    %1324 = vmatpush.msra.mxu0 0.0
    %1325 = vmatpush.msra.mxu0 0.0
    %1326 = vmatpush.msra.mxu0 0.0
    %1327 = vmatpush.msra.mxu0 0.0
    %1328 = vmatpush.msra.mxu0 %v1308
    %1329 = vmatpush.msra.mxu0 %v1307
    %1330 = vmatpush.msra.mxu0 %v1306
    %1331 = vmatpush.msra.mxu0 %v1305
    %1332 = vmatmul.f32.gmra.mxu0 %v1314
    %v1333 = vpop.f32.mrf.mxu0
    %v1334 = vadd.f32 %v1311, %v1333
    %1335 = vdwg.mxu0
    %vm1336 = vcmask 31744
    %1337 = vst.msk [vmem:[%s4] sm:$0xff] %vm1336, %v1334
    // Predicated region
    $region26: #{tpu_custom_call.1} parent=1 // pred_check
      _
    $region27: #{tpu_custom_call.1} parent=1 // pred_check_branch
      %1339 = sbr.rel (0) target = $region29
    $region28: #{tpu_custom_call.1} parent=1 // pred_region
      _
    $region29: #{tpu_custom_call.1} parent=1 // pred_fallthru
      _
    // Predicated region
    $region30: #{tpu_custom_call.1} parent=1 // pred_check
      _
    $region31: #{tpu_custom_call.1} parent=1 // pred_check_branch
      %1341 = sbr.rel (0) target = $region33
    $region32: #{tpu_custom_call.1} parent=1 // pred_region
      _
    $region33: #{tpu_custom_call.1} parent=1 // pred_fallthru
      _
    %1342 = vsyncpa [#allocation3], 1
    %1343 = vsyncpa [#allocation5], 1

</llo_original>
